<compile_context>
chip_gen: v7x
topology: tpu7x:2x2x1
jax: 0.10.0
libtpu: 0.0.40
codegen_flags: <defaults>
</compile_context>

<pallas_src>
import math

import jax
import jax.numpy as jnp
from jax import lax
from jax.experimental import pallas as pl
from jax.experimental.pallas import tpu as pltpu

_LOG2E = math.log2(math.e)


def _pick_tile(n, preferred):
    """Largest preferred tile that divides n; falls back to the full dim."""
    for t in preferred:
        if t <= n and n % t == 0:
            return t
    return n


# --------------------------- tiled linear kernel (rows x cols x K-reduction) ---------------------------

def _linear_kernel(x_ref, w_ref, b_ref, o_ref, acc_ref):
    # x: (tn, tk), w: (tk, tE) bf16, b: (1, tE) f32; reduction over grid axis 2.
    k = pl.program_id(2)

    @pl.when(k == 0)
    def _():
        acc_ref[...] = jnp.zeros_like(acc_ref)

    acc_ref[...] += jnp.dot(x_ref[...].astype(jnp.bfloat16),
                            w_ref[...].astype(jnp.bfloat16),
                            preferred_element_type=jnp.float32)

    @pl.when(k == pl.num_programs(2) - 1)
    def _():
        o_ref[...] = (acc_ref[...] + b_ref[...].astype(jnp.float32)).astype(o_ref.dtype)


def pallas_linear(x, w, b, out_dtype=jnp.float32):
    """y = x @ w + b with x:(N,Ein), w:(Ein,Eout) bf16, b:(1,Eout); bf16 MXU, f32 accumulate."""
    N, Ein = x.shape
    Eout = w.shape[1]
    tn = _pick_tile(N, (512, 256, 128, 64, 32, 16, 8))
    tE = _pick_tile(Eout, (512, 256, 128))   # lane-dense output tiles (multiple of 128 or full)
    tk = _pick_tile(Ein, (512, 256, 128))    # reduction tile (multiple of 128 or full Ein)
    grid = (N // tn, Eout // tE, Ein // tk)

    # TODO(synk): invariant blocks could be single-buffered (pl.Buffered(1)) to save VMEM.
    flops = 2 * N * Ein * Eout
    bytes_accessed = (N * Ein * x.dtype.itemsize * (Eout // tE)        # x re-read per col tile
                      + Ein * Eout * w.dtype.itemsize * (N // tn)      # w re-read per row tile
                      + Eout * b.dtype.itemsize
                      + N * Eout * jnp.dtype(out_dtype).itemsize)

    return pl.pallas_call(
        _linear_kernel,
        out_shape=jax.ShapeDtypeStruct((N, Eout), out_dtype),
        grid_spec=pltpu.PrefetchScalarGridSpec(
            num_scalar_prefetch=0,
            grid=grid,
            in_specs=[
                pl.BlockSpec((tn, tk), lambda i, j, k: (i, k)),
                pl.BlockSpec((tk, tE), lambda i, j, k: (k, j)),
                pl.BlockSpec((1, tE), lambda i, j, k: (0, j)),
            ],
            out_specs=pl.BlockSpec((tn, tE), lambda i, j, k: (i, j)),
            scratch_shapes=[pltpu.VMEM((tn, tE), jnp.float32)],
        ),
        compiler_params=pltpu.CompilerParams(
            dimension_semantics=("parallel", "parallel", "arbitrary"),
            vmem_limit_bytes=32 * 1024 * 1024,
        ),
        cost_estimate=pl.CostEstimate(flops=flops, transcendentals=0,
                                      bytes_accessed=int(bytes_accessed)),
    )(x, w, b)


# ----------------------------- flash attention kernel (base-2 online softmax) -----------------------------

def _flash_attn_kernel(q_ref, k_ref, v_ref, o_ref, m_sc, l_sc, acc_sc):
    # q: (tq, Dh) bf16, pre-scaled by log2(e)/sqrt(Dh) -> scores are in log2 units.
    ki = pl.program_id(3)

    @pl.when(ki == 0)
    def _():
        m_sc[...] = jnp.full_like(m_sc, -jnp.inf)
        l_sc[...] = jnp.zeros_like(l_sc)
        acc_sc[...] = jnp.zeros_like(acc_sc)

    # Contract last dims directly: no in-kernel K transpose is materialized.
    s = lax.dot_general(q_ref[...], k_ref[...], (((1,), (1,)), ((), ())),
                        preferred_element_type=jnp.float32)           # (tq, tkv) f32

    m_prev = m_sc[...]
    m_new = jnp.maximum(m_prev, jnp.max(s, axis=-1, keepdims=True))
    # TODO(synk): once masking is added, guard against fully-masked rows (m_new == -inf -> NaN).
    alpha = jnp.exp2(m_prev - m_new)                                   # base-2 softmax (EUP pow2 only)
    p = jnp.exp2(s - m_new)
    l_sc[...] = alpha * l_sc[...] + jnp.sum(p, axis=-1, keepdims=True)
    acc_sc[...] = alpha * acc_sc[...] + jnp.dot(
        p.astype(v_ref.dtype), v_ref[...], preferred_element_type=jnp.float32)
    m_sc[...] = m_new

    @pl.when(ki == pl.num_programs(3) - 1)
    def _():
        o_ref[...] = (acc_sc[...] *
                      pl.reciprocal(l_sc[...], approx=True)).astype(o_ref.dtype)


def pallas_flash_mha(q, k, v, *, block_q=None, block_kv=None):
    """q/k/v: (B, H, S, Dh) bf16 (q pre-scaled by log2(e)/sqrt(Dh)) -> (B, H, S, Dh) bf16."""
    B, H, S, Dh = q.shape
    tq = block_q or _pick_tile(S, (512, 256, 128, 64, 32, 16, 8))
    if block_kv is not None:
        tkv = block_kv
    else:
        # Keep K/V resident per (b, h) (KV block index constant across qi and ki -> loaded once)
        # when the double-buffered K+V blocks plus the (tq, S) f32 score temporaries fit a
        # conservative budget that is safe on v7x's 64 MiB VMEM per TensorCore.
        resident_bytes = 2 * 2 * S * Dh * q.dtype.itemsize + 2 * tq * S * 4
        if resident_bytes <= 24 * 1024 * 1024:
            tkv = S
        else:
            # Lane-dense KV tiles: multiples of 128 preferred (sub-128 only as a last resort).
            tkv = _pick_tile(S, (1024, 512, 256, 128, 64, 32, 16, 8))
    assert S % tq == 0 and S % tkv == 0
    grid = (B, H, S // tq, S // tkv)

    q_spec = pl.BlockSpec((pl.Squeezed(), pl.Squeezed(), tq, Dh),
                          lambda b, h, qi, ki: (b, h, qi, 0))
    kv_spec = pl.BlockSpec((pl.Squeezed(), pl.Squeezed(), tkv, Dh),
                           lambda b, h, qi, ki: (b, h, ki, 0))
    o_spec = pl.BlockSpec((pl.Squeezed(), pl.Squeezed(), tq, Dh),
                          lambda b, h, qi, ki: (b, h, qi, 0))

    # TODO(synk): for Dh < 128, pack 128//Dh heads per grid step (dot_general batch dims) so the
    #             PV matmul and output store are full 128 lanes wide.
    kv_passes = 1 if tkv == S else (S // tq)
    itemsize = jnp.dtype(q.dtype).itemsize
    bytes_accessed = (B * H * S * Dh * itemsize                       # q
                      + 2 * B * H * S * Dh * itemsize * kv_passes     # k, v (incl. re-reads)
                      + B * H * S * Dh * itemsize)                    # out
    cost = pl.CostEstimate(flops=4 * B * H * S * S * Dh,
                           transcendentals=B * H * S * S,
                           bytes_accessed=int(bytes_accessed))

    return pl.pallas_call(
        _flash_attn_kernel,
        out_shape=jax.ShapeDtypeStruct((B, H, S, Dh), q.dtype),
        grid_spec=pltpu.PrefetchScalarGridSpec(
            num_scalar_prefetch=0,
            grid=grid,
            in_specs=[q_spec, kv_spec, kv_spec],
            out_specs=o_spec,
            scratch_shapes=[
                pltpu.VMEM((tq, 1), jnp.float32),    # running max (base-2)
                pltpu.VMEM((tq, 1), jnp.float32),    # running sum
                pltpu.VMEM((tq, Dh), jnp.float32),   # output accumulator
            ],
        ),
        compiler_params=pltpu.CompilerParams(
            # B, H, S//tq are parallel (megacore sharding on v7x); KV axis is the reduction.
            dimension_semantics=("parallel", "parallel", "parallel", "arbitrary"),
            vmem_limit_bytes=48 * 1024 * 1024,       # stays under v7x's 64 MiB physical VMEM
        ),
        cost_estimate=cost,
    )(q, k, v)


# -------------------- output projection with the head-merge folded in (no XLA transpose) --------------------

def _out_proj_kernel(a_ref, w_ref, b_ref, o_ref, acc_ref):
    # a: (ts, Dh) bf16 (attention out for head h), w: (Dh, tE) bf16 (rows h*Dh..), b: (1, tE) f32.
    h = pl.program_id(3)

    @pl.when(h == 0)
    def _():
        acc_ref[...] = jnp.zeros_like(acc_ref)

    acc_ref[...] += jnp.dot(a_ref[...].astype(jnp.bfloat16),
                            w_ref[...].astype(jnp.bfloat16),
                            preferred_element_type=jnp.float32)

    @pl.when(h == pl.num_programs(3) - 1)
    def _():
        o_ref[...] = (acc_ref[...] + b_ref[...].astype(jnp.float32)).astype(o_ref.dtype)


def pallas_out_proj(attn, w, b, out_dtype=jnp.float32):
    """out[b, s, :] = sum_h attn[b, h, s, :] @ w[h*Dh:(h+1)*Dh, :] + b  (attn in native BHSD layout)."""
    B, H, S, Dh = attn.shape
    Eout = w.shape[1]
    ts = _pick_tile(S, (512, 256, 128, 64, 32, 16, 8))
    tE = _pick_tile(Eout, (512, 256, 128))
    grid = (B, S // ts, Eout // tE, H)

    flops = 2 * B * S * H * Dh * Eout
    bytes_accessed = (attn.size * attn.dtype.itemsize * (Eout // tE)
                      + w.size * w.dtype.itemsize * B * (S // ts)
                      + Eout * b.dtype.itemsize
                      + B * S * Eout * jnp.dtype(out_dtype).itemsize)

    return pl.pallas_call(
        _out_proj_kernel,
        out_shape=jax.ShapeDtypeStruct((B, S, Eout), out_dtype),
        grid_spec=pltpu.PrefetchScalarGridSpec(
            num_scalar_prefetch=0,
            grid=grid,
            in_specs=[
                pl.BlockSpec((pl.Squeezed(), pl.Squeezed(), ts, Dh),
                             lambda bi, si, j, h: (bi, h, si, 0)),
                pl.BlockSpec((Dh, tE), lambda bi, si, j, h: (h, j)),
                pl.BlockSpec((1, tE), lambda bi, si, j, h: (0, j)),
            ],
            out_specs=pl.BlockSpec((pl.Squeezed(), ts, tE),
                                   lambda bi, si, j, h: (bi, si, j)),
            scratch_shapes=[pltpu.VMEM((ts, tE), jnp.float32)],
        ),
        compiler_params=pltpu.CompilerParams(
            dimension_semantics=("parallel", "parallel", "parallel", "arbitrary"),
            vmem_limit_bytes=32 * 1024 * 1024,
        ),
        cost_estimate=pl.CostEstimate(flops=flops, transcendentals=0,
                                      bytes_accessed=int(bytes_accessed)),
    )(attn, w, b)


# --------------------------------- module wrapper ---------------------------------

class FlashAttentionPallas:
    def __init__(self, embed_dim, num_heads, dropout=0.1, key=None,
                 block_q=None, block_kv=None):
        assert embed_dim % num_heads == 0
        self.embed_dim = embed_dim
        self.num_heads = num_heads
        self.head_dim = embed_dim // num_heads
        self.block_q = block_q
        self.block_kv = block_kv
        # TODO(synk): dropout on attention weights is not applied (inference semantics).
        if key is None:
            key = jax.random.PRNGKey(42)
        ks = jax.random.split(key, 8)
        bound = 1.0 / math.sqrt(embed_dim)

        def mk_w(k):  # stored as (E_in, E_out) == PyTorch weight.T
            return jax.random.uniform(k, (embed_dim, embed_dim), jnp.float32, -bound, bound)

        def mk_b(k):
            return jax.random.uniform(k, (1, embed_dim), jnp.float32, -bound, bound)

        self.wq, self.bq = mk_w(ks[0]), mk_b(ks[1])
        self.wk, self.bk = mk_w(ks[2]), mk_b(ks[3])
        self.wv, self.bv = mk_w(ks[4]), mk_b(ks[5])
        self.wo, self.bo = mk_w(ks[6]), mk_b(ks[7])

        # bf16 MXU-ready weights; the base-2 softmax scale log2(e)/sqrt(head_dim) is folded into
        # the Q projection (zero per-score cost inside the attention kernel, exp2 instead of exp).
        scale = _LOG2E / math.sqrt(self.head_dim)
        self.wq_s_bf16 = (self.wq * scale).astype(jnp.bfloat16)
        self.bq_s = self.bq * scale
        self.wk_bf16 = self.wk.astype(jnp.bfloat16)
        self.wv_bf16 = self.wv.astype(jnp.bfloat16)
        self.wo_bf16 = self.wo.astype(jnp.bfloat16)
        # Fused QKV weights for the self-attention fast path: activations are read from HBM once.
        self.wqkv_bf16 = jnp.concatenate(
            [self.wq_s_bf16, self.wk_bf16, self.wv_bf16], axis=1)
        self.bqkv = jnp.concatenate([self.bq_s, self.bk, self.bv], axis=1)

    def __call__(self, query, key, value, mask=None):
        # TODO(synk): the optional attention mask is not implemented (mask=None path only).
        assert mask is None
        B, S, E = query.shape
        H, Dh = self.num_heads, self.head_dim
        N = B * S

        if (query is key) and (key is value):
            # Self-attention fast path: one fused QKV projection kernel.
            qkv = pallas_linear(query.reshape(N, E), self.wqkv_bf16, self.bqkv,
                                out_dtype=jnp.bfloat16)                  # (N, 3E) bf16
            # TODO(synk): when Dh % 128 == 0, index heads straight out of the (N, 3E) buffer from
            #             the attention BlockSpec (column offsets h*Dh / E+h*Dh / 2E+h*Dh) and
            #             drop this XLA transpose entirely.
            qkv = qkv.reshape(B, S, 3, H, Dh).transpose(2, 0, 3, 1, 4)   # (3,B,H,S,Dh)
            q, k, v = qkv[0], qkv[1], qkv[2]
        else:
            def proj(x, w, b):
                y = pallas_linear(x.reshape(N, E), w, b, out_dtype=jnp.bfloat16)
                return y.reshape(B, S, H, Dh).transpose(0, 2, 1, 3)      # (B,H,S,Dh)
            q = proj(query, self.wq_s_bf16, self.bq_s)
            k = proj(key, self.wk_bf16, self.bk)
            v = proj(value, self.wv_bf16, self.bv)

        attn = pallas_flash_mha(q, k, v, block_q=self.block_q,
                                block_kv=self.block_kv)                  # (B,H,S,Dh) bf16

        if Dh % 8 == 0:
            # Head-merge folded into the output projection: attn consumed in native BHSD layout,
            # heads reduced on a grid axis -> no full-tensor XLA transpose on the output side.
            return pallas_out_proj(attn, self.wo_bf16, self.bo, out_dtype=jnp.float32)
        # Fallback for tiny head dims that violate the (8, 128) block constraint.
        merged = attn.transpose(0, 2, 1, 3).reshape(N, E)
        return pallas_linear(merged, self.wo_bf16, self.bo,
                             out_dtype=jnp.float32).reshape(B, S, E)


# Pure-JAX f32 reference for sanity checking.
def _ref_forward(mod, query, key, value):
    B, S, E = query.shape
    H, Dh = mod.num_heads, mod.head_dim

    def proj(x, w, b):
        return (x.reshape(B * S, E) @ w + b).reshape(B, S, H, Dh).transpose(0, 2, 1, 3)

    q = proj(query, mod.wq, mod.bq)
    k = proj(key, mod.wk, mod.bk)
    v = proj(value, mod.wv, mod.bv)
    s = jnp.einsum("bhqd,bhkd->bhqk", q, k) / math.sqrt(Dh)
    p = jax.nn.softmax(s, axis=-1)
    o = jnp.einsum("bhqk,bhkd->bhqd", p, v)
    o = o.transpose(0, 2, 1, 3).reshape(B * S, E)
    return (o @ mod.wo + mod.bo).reshape(B, S, E)


if __name__ == "__main__":
    # Small shapes. block_q=64 / block_kv=128 gives 4 Q-blocks x 2 KV-blocks per (batch, head),
    # exercising the online-softmax init / accumulate / finalize path with lane-dense KV tiles.
    B, S, E, H = 2, 256, 128, 4   # head_dim = 32
    key = jax.random.PRNGKey(0)
    kx, kck, kcv, kw = jax.random.split(key, 4)
    x = jax.random.normal(kx, (B, S, E), jnp.float32)

    mod = FlashAttentionPallas(embed_dim=E, num_heads=H, dropout=0.1, key=kw,
                               block_q=64, block_kv=128)

    # Self-attention (fused QKV fast path, multi-block online softmax).
    out_self = jax.block_until_ready(mod(x, x, x))
    ref_self = _ref_forward(mod, x, x, x)
    assert out_self.shape == (B, S, E)
    err = float(jnp.max(jnp.abs(out_self - ref_self)))
    assert jnp.allclose(out_self, ref_self, atol=3e-2, rtol=3e-2), f"self-attn mismatch {err}"

    # Cross-attention (separate projection path).
    k_in = jax.random.normal(kck, (B, S, E), jnp.float32)
    v_in = jax.random.normal(kcv, (B, S, E), jnp.float32)
    out_cross = jax.block_until_ready(mod(x, k_in, v_in))
    ref_cross = _ref_forward(mod, x, k_in, v_in)
    err = float(jnp.max(jnp.abs(out_cross - ref_cross)))
    assert jnp.allclose(out_cross, ref_cross, atol=3e-2, rtol=3e-2), f"cross-attn mismatch {err}"

    # Default tiling path: tq=256, resident K/V per (b, h) (single KV block, loaded once).
    mod_default = FlashAttentionPallas(embed_dim=E, num_heads=H, dropout=0.1, key=kw)
    out_def = jax.block_until_ready(mod_default(x, x, x))
    err = float(jnp.max(jnp.abs(out_def - ref_self)))
    assert jnp.allclose(out_def, ref_self, atol=3e-2, rtol=3e-2), f"default-path mismatch {err}"

    print("KERNEL_OK")
</pallas_src>

<mosaic_0001>
module attributes {stable_mosaic.version = 11 : i64} {
  func.func @_linear_kernel(%arg0: i32, %arg1: i32, %arg2: i32, %arg3: memref<512x128xf32, #tpu.memory_space<vmem>>, %arg4: memref<128x128xbf16, #tpu.memory_space<vmem>>, %arg5: memref<1x128xf32, #tpu.memory_space<vmem>>, %arg6: memref<512x128xbf16, #tpu.memory_space<vmem>>, %arg7: memref<512x128xf32, #tpu.memory_space<vmem>>) attributes {dimension_semantics = [#tpu.dimension_semantics<parallel>, #tpu.dimension_semantics<parallel>, #tpu.dimension_semantics<arbitrary>], iteration_bounds = array<i64: 1, 3, 1>, scalar_prefetch = 0 : i64, scratch_operands = 1 : i64, tpu.core_type = #tpu.core_type<tc>, window_params = [{transform_indices = @transform_0, window_bounds = array<i64: 512, 128>}, {transform_indices = @transform_1, window_bounds = array<i64: 128, 128>}, {transform_indices = @transform_2, window_bounds = array<i64: 1, 128>}, {transform_indices = @transform_3, window_bounds = array<i64: 512, 128>}]} {
    %c0_i32 = arith.constant 0 : i32
    %0 = arith.cmpi eq, %arg2, %c0_i32 : i32
    %1 = arith.extui %0 : i1 to i32
    %c0_i32_0 = arith.constant 0 : i32
    %2 = arith.cmpi ne, %1, %c0_i32_0 : i32
    scf.if %2 {
      %cst_10 = arith.constant 0.000000e+00 : f32
      %13 = vector.broadcast %cst_10 : f32 to vector<512x128xf32>
      %c0_11 = arith.constant 0 : index
      %c0_12 = arith.constant 0 : index
      %14 = vector.load %arg7[%c0_11, %c0_12] : memref<512x128xf32, #tpu.memory_space<vmem>>, vector<512x128xf32>
      tpu.vector_store %arg7[%c0_11, %c0_12], %13 {strides = array<i32>} : memref<512x128xf32, #tpu.memory_space<vmem>>, vector<512x128xf32>,
    } else {
    }
    %c0 = arith.constant 0 : index
    %c0_1 = arith.constant 0 : index
    %3 = vector.load %arg7[%c0, %c0_1] : memref<512x128xf32, #tpu.memory_space<vmem>>, vector<512x128xf32>
    %c0_2 = arith.constant 0 : index
    %c0_3 = arith.constant 0 : index
    %4 = vector.load %arg3[%c0_2, %c0_3] : memref<512x128xf32, #tpu.memory_space<vmem>>, vector<512x128xf32>
    %5 = arith.truncf %4 : vector<512x128xf32> to vector<512x128xbf16>
    %c0_4 = arith.constant 0 : index
    %c0_5 = arith.constant 0 : index
    %6 = vector.load %arg4[%c0_4, %c0_5] : memref<128x128xbf16, #tpu.memory_space<vmem>>, vector<128x128xbf16>
    %cst = arith.constant dense<0.000000e+00> : vector<512x128xf32>
    %7 = tpu.matmul %5, %6, %cst {dimension_numbers = #tpu.dot_dimension_numbers<[1], [0], [0], [1], [0, 0, 1, 1], [], []>} : vector<512x128xbf16>, vector<128x128xbf16>, vector<512x128xf32> -> vector<512x128xf32>
    %8 = arith.addf %3, %7 : vector<512x128xf32>
    %c0_6 = arith.constant 0 : index
    %c0_7 = arith.constant 0 : index
    %9 = vector.load %arg7[%c0_6, %c0_7] : memref<512x128xf32, #tpu.memory_space<vmem>>, vector<512x128xf32>
    tpu.vector_store %arg7[%c0_6, %c0_7], %8 {strides = array<i32>} : memref<512x128xf32, #tpu.memory_space<vmem>>, vector<512x128xf32>,
    %c0_i32_8 = arith.constant 0 : i32
    %10 = arith.cmpi eq, %arg2, %c0_i32_8 : i32
    %11 = arith.extui %10 : i1 to i32
    %c0_i32_9 = arith.constant 0 : i32
    %12 = arith.cmpi ne, %11, %c0_i32_9 : i32
    scf.if %12 {
      %c0_10 = arith.constant 0 : index
      %c0_11 = arith.constant 0 : index
      %13 = vector.load %arg7[%c0_10, %c0_11] : memref<512x128xf32, #tpu.memory_space<vmem>>, vector<512x128xf32>
      %c0_12 = arith.constant 0 : index
      %c0_13 = arith.constant 0 : index
      %14 = vector.load %arg5[%c0_12, %c0_13] : memref<1x128xf32, #tpu.memory_space<vmem>>, vector<1x128xf32>
      %15 = vector.broadcast %14 : vector<1x128xf32> to vector<512x128xf32>
      %16 = arith.addf %13, %15 : vector<512x128xf32>
      %17 = arith.truncf %16 : vector<512x128xf32> to vector<512x128xbf16>
      %c0_14 = arith.constant 0 : index
      %c0_15 = arith.constant 0 : index
      %18 = vector.load %arg6[%c0_14, %c0_15] : memref<512x128xbf16, #tpu.memory_space<vmem>>, vector<512x128xbf16>
      tpu.vector_store %arg6[%c0_14, %c0_15], %17 {strides = array<i32>} : memref<512x128xbf16, #tpu.memory_space<vmem>>, vector<512x128xbf16>,
    } else {
    }
    return
  }
  func.func @transform_0(%arg0: i32, %arg1: i32, %arg2: i32) -> (i32, i32) {
    %c0_i32 = arith.constant 0 : i32
    return %arg0, %arg2 : i32, i32
  }
  func.func @transform_1(%arg0: i32, %arg1: i32, %arg2: i32) -> (i32, i32) {
    %c0_i32 = arith.constant 0 : i32
    return %arg2, %arg1 : i32, i32
  }
  func.func @transform_2(%arg0: i32, %arg1: i32, %arg2: i32) -> (i32, i32) {
    %c0_i32 = arith.constant 0 : i32
    %c0_i32_0 = arith.constant 0 : i32
    return %c0_i32, %arg1 : i32, i32
  }
  func.func @transform_3(%arg0: i32, %arg1: i32, %arg2: i32) -> (i32, i32) {
    %c0_i32 = arith.constant 0 : i32
    return %arg0, %arg1 : i32, i32
  }
}

</mosaic_0001>

<llo_original>
// kernel: tpu_custom_call.1
$region0: #{tpu_custom_call.1}
  #allocation0 [shape = 'u32[]', space=smem, size = 0x4, offset = 0x4, fixed_abs, tag = 'smem constant byte address 0x4 - core index']
  #allocation1 [shape = 'u32[144,128]{1,0:T(1,128)}', space=vmem, size = 0x12000, scoped, tag = 'internal scratch']
  #allocation2 [shape = 'f32[512,128]{1,0:T(8,128)}', space=vmem, size = 0x40000, scoped, tag = 'scratch operand']
  %s0 = inlined_call_operand.hbm [shape: f32[512,128], index: 0, kind: input, shape index: {}]
  %s1 = inlined_call_operand.hbm [shape: bf16[128,384], index: 1, kind: input, shape index: {}]
  %s2 = inlined_call_operand.vmem [shape: f32[1,384], index: 2, kind: input, shape index: {}]
  %s3 = inlined_call_operand.hbm [shape: bf16[512,384], index: 3, kind: output, shape index: {}]
  %s4 = sld [smem:[#allocation0]]
  $region61: #{tpu_custom_call.1} parent=0
    _
  %s6 = ssub.s32 1, %s4
  %s7 = scalar_select 0, %s6, %s4
  $region1: #{tpu_custom_call.1} parent=0
    #allocation3 [shape = 'u8[262144]{0}', space=vmem, size = 0x40000, scoped, tag = 'input window, operand 0, single buffered']
    #allocation4 [shape = 's32[2]{0}', space=sflag, size = 0x8, scoped, tag = 'scoped memory for tpu_custom_call.1']
    #allocation5 [shape = 's32[2]{0}', space=sflag, size = 0x8, scoped, tag = 'scoped memory for tpu_custom_call.1']
    #allocation6 [shape = 'u8[65536]{0}', space=vmem, size = 0x10000, scoped, tag = 'input window, operand 1']
    #allocation7 [shape = 's32[2]{0}', space=sflag, size = 0x8, scoped, tag = 'scoped memory for tpu_custom_call.1']
    #allocation8 [shape = 'u8[262144]{0}', space=vmem, size = 0x40000, scoped, tag = 'output window, operand 0']
    %8 = vsyncpa [#allocation4], 0
    %9 = vsyncpa [#allocation7], 0
    %s10 = scalar_lea.sflag [#allocation7], 1
    %11 = vsyncpa %s10, 0
    %12 = vsyncpa [#allocation5], 0
    %s13 = scalar_lea.sflag [#allocation5], 1
    %14 = vsyncpa %s13, 0
    loop: start=0, step=1, limit=5
    $region2: #{tpu_custom_call.1} parent=1 // loop_pre_header
      _
    $region3: #{tpu_custom_call.1} parent=1 // loop_header
      %s16 = sphi 0, %s20
      %p17 = scmp.ge.s32.totalorder %s16, 5
      %s23 = sphi 0, %s42
      %s24 = sphi 0, %s38
      %s25 = sphi 0, %s34
      %s26 = sphi 0, %s23
      %s27 = sphi 0, %s24
      %s28 = sphi 0, %s25
      %s29 = sphi 0, %s26
      %s30 = sphi 0, %s27
      %s31 = sphi 0, %s28
      %s47 = sphi 0, %s49
      %s50 = sphi 0, %s47
      %s51 = sphi 0, %s50
      %s67 = sphi 0, %s51
      %s75 = sphi 0, %s77
      %s78 = sphi 0, %s75
      %s79 = sphi 0, %s78
      %s95 = sphi 0, %s79
      %s101 = sphi 0, %s103
      %s104 = sphi 0, %s101
      %s105 = sphi 0, %s104
      %s121 = sphi 0, %s105
      %s129 = sphi 0, %s131
      %s132 = sphi 0, %s129
      %s133 = sphi 0, %s132
      %s149 = sphi 0, %s133
    $region4: #{tpu_custom_call.1} parent=1 // loop_header_branch
      %19 = sbr.rel (%p17) target = $region8
    $region5: #{tpu_custom_call.1} parent=1 // loop_body
      %s21 = ssub.s32 %s16, 1
      %s22 = ssub.s32 %s16, 2
      %s32 = sadd.s32 1, %s25
      %p33 = scmp.ge.s32.totalorder %s32, 1
      %s34 = scalar_select %p33, 0, %s32
      %s35 = sadd.s32 1, %s24
      %s36 = scalar_select %p33, %s35, %s24
      %p37 = scmp.ge.s32.totalorder %s36, 3
      %s38 = scalar_select %p37, 0, %s36
      %s39 = sadd.s32 1, %s23
      %s40 = scalar_select %p37, %s39, %s23
      %p41 = scmp.ge.s32.totalorder %s40, 1
      %s42 = scalar_select %p41, 0, %s40
      %s43 = ssub.s32 %s23, %s42
      %s44 = ssub.s32 %s25, %s34
      %s45 = sor.u32 %s43, %s44
      %p46 = scmp.eq.s32.totalorder %s45, 0
      %s48 = sadd.s32 %s47, 1
      %s49 = scalar_select %p46, %s47, %s48
      %p52 = pneg %p46
      %p53 = scmp.eq.s32.totalorder %s16, 2
      %p54 = por %p52, %p53
      %p55 = scmp.ne.s32.totalorder %s47, %s50
      %p56 = scmp.eq.s32.totalorder %s16, 0
      %p57 = por %p55, %p56
      %p58 = scmp.ne.s32.totalorder %s47, %s50
      %p59 = scmp.eq.s32.totalorder %s21, 2
      %p60 = por %p58, %p59
      %p61 = scmp.ne.s32.totalorder %s50, %s51
      %p62 = scmp.eq.s32.totalorder %s21, 0
      %p63 = por %p61, %p62
      %p64 = scmp.ne.s32.totalorder %s50, %s51
      %p65 = scmp.eq.s32.totalorder %s22, 2
      %p66 = por %p64, %p65
      %p68 = scmp.ne.s32.totalorder %s51, %s67
      %p69 = scmp.eq.s32.totalorder %s22, 0
      %p70 = por %p68, %p69
      %s71 = ssub.s32 %s25, %s34
      %s72 = ssub.s32 %s24, %s38
      %s73 = sor.u32 %s71, %s72
      %p74 = scmp.eq.s32.totalorder %s73, 0
      %s76 = sadd.s32 %s75, 1
      %s77 = scalar_select %p74, %s75, %s76
      %p80 = pneg %p74
      %p81 = scmp.eq.s32.totalorder %s16, 2
      %p82 = por %p80, %p81
      %p83 = scmp.ne.s32.totalorder %s75, %s78
      %p84 = scmp.eq.s32.totalorder %s16, 0
      %p85 = por %p83, %p84
      %p86 = scmp.ne.s32.totalorder %s75, %s78
      %p87 = scmp.eq.s32.totalorder %s21, 2
      %p88 = por %p86, %p87
      %p89 = scmp.ne.s32.totalorder %s78, %s79
      %p90 = scmp.eq.s32.totalorder %s21, 0
      %p91 = por %p89, %p90
      %p92 = scmp.ne.s32.totalorder %s78, %s79
      %p93 = scmp.eq.s32.totalorder %s22, 2
      %p94 = por %p92, %p93
      %p96 = scmp.ne.s32.totalorder %s79, %s95
      %p97 = scmp.eq.s32.totalorder %s22, 0
      %p98 = por %p96, %p97
      %s99 = ssub.s32 %s24, %s38
      %p100 = scmp.eq.s32.totalorder %s99, 0
      %s102 = sadd.s32 %s101, 1
      %s103 = scalar_select %p100, %s101, %s102
      %p106 = pneg %p100
      %p107 = scmp.eq.s32.totalorder %s16, 2
      %p108 = por %p106, %p107
      %p109 = scmp.ne.s32.totalorder %s101, %s104
      %p110 = scmp.eq.s32.totalorder %s16, 0
      %p111 = por %p109, %p110
      %p112 = scmp.ne.s32.totalorder %s101, %s104
      %p113 = scmp.eq.s32.totalorder %s21, 2
      %p114 = por %p112, %p113
      %p115 = scmp.ne.s32.totalorder %s104, %s105
      %p116 = scmp.eq.s32.totalorder %s21, 0
      %p117 = por %p115, %p116
      %p118 = scmp.ne.s32.totalorder %s104, %s105
      %p119 = scmp.eq.s32.totalorder %s22, 2
      %p120 = por %p118, %p119
      %p122 = scmp.ne.s32.totalorder %s105, %s121
      %p123 = scmp.eq.s32.totalorder %s22, 0
      %p124 = por %p122, %p123
      %s125 = ssub.s32 %s23, %s42
      %s126 = ssub.s32 %s24, %s38
      %s127 = sor.u32 %s125, %s126
      %p128 = scmp.eq.s32.totalorder %s127, 0
      %s130 = sadd.s32 %s129, 1
      %s131 = scalar_select %p128, %s129, %s130
      %p134 = pneg %p128
      %p135 = scmp.eq.s32.totalorder %s16, 2
      %p136 = por %p134, %p135
      %p137 = scmp.ne.s32.totalorder %s129, %s132
      %p138 = scmp.eq.s32.totalorder %s16, 0
      %p139 = por %p137, %p138
      %p140 = scmp.ne.s32.totalorder %s129, %s132
      %p141 = scmp.eq.s32.totalorder %s21, 2
      %p142 = por %p140, %p141
      %p143 = scmp.ne.s32.totalorder %s132, %s133
      %p144 = scmp.eq.s32.totalorder %s21, 0
      %p145 = por %p143, %p144
      %p146 = scmp.ne.s32.totalorder %s132, %s133
      %p147 = scmp.eq.s32.totalorder %s22, 2
      %p148 = por %p146, %p147
      %p150 = scmp.ne.s32.totalorder %s133, %s149
      %p151 = scmp.eq.s32.totalorder %s22, 0
      %p152 = por %p150, %p151
      %p153 = scmp.le.s32.totalorder 1, %s16
      %p154 = scmp.lt.s32.totalorder %s16, 4
      %p155 = pnand %p153, %p154
      %p156 = pneg %p155
      // Predicated region
      $region9: #{tpu_custom_call.1} parent=5 // pred_check
        _
      $region10: #{tpu_custom_call.1} parent=5 // pred_check_branch
        %158 = sbr.rel (%p155) target = $region12
      $region11: #{tpu_custom_call.1} parent=5 // pred_region
        %s159 = ssub.s32 %s16, 1
        // Predicated region
        $region13: #{tpu_custom_call.1} parent=11 // pred_check
          %p160 = pneg %p63
        $region14: #{tpu_custom_call.1} parent=11 // pred_check_branch
          %162 = sbr.rel (%p160) target = $region16
        $region15: #{tpu_custom_call.1} parent=11 // pred_region
          %s163 = smul.u32 64, %s26
          %s165 = ssub.s32 8192, 8192
          %166 = vsyncadd [#allocation4], %s165
          %s167 = sadd.s32 %s28, %s163
          %s168 = smul.addr %s167, 128
          %s169 = scalar_lea.hbm %s0, %s168
          %s170 = sshll.u32 [#allocation3], 4
          %s171 = int_to_ptr.vmem [resolvable:$true] %s170
          %176 = dma.hbm_to_vmem [thread:$0]  %s169, 8192, %s171, [#allocation4], 128, 128, 8
        $region16: #{tpu_custom_call.1} parent=11 // pred_fallthru
          _
      $region12: #{tpu_custom_call.1} parent=5 // pred_fallthru
        _
      %p177 = scmp.lt.s32.totalorder %s16, 3
      // Predicated region
      $region17: #{tpu_custom_call.1} parent=5 // pred_check
        %p178 = pneg %p177
      $region18: #{tpu_custom_call.1} parent=5 // pred_check_branch
        %180 = sbr.rel (%p178) target = $region20
      $region19: #{tpu_custom_call.1} parent=5 // pred_region
        // Predicated region
        $region21: #{tpu_custom_call.1} parent=19 // pred_check
          %p181 = pneg %p85
        $region22: #{tpu_custom_call.1} parent=19 // pred_check_branch
          %183 = sbr.rel (%p181) target = $region24
        $region23: #{tpu_custom_call.1} parent=19 // pred_region
          %s184 = sand.u32 %s75, 1
          %s185 = scalar_lea.sflag [#allocation7], %s184
          %s186 = sand.u32 %s75, 1
          %s187 = smul.addr %s186, 64
          %s188 = scalar_lea.vmem [#allocation6], %s187
          %s189 = smul.u32 16, %s25
          %s191 = ssub.s32 1024, 1024
          %192 = vsyncadd %s185, %s191
          %s193 = smul.addr %s189, 3
          %s194 = sadd.s32 %s24, %s193
          %s195 = smul.addr %s194, 64
          %s196 = scalar_lea.hbm %s1, %s195
          %s197 = sshll.u32 %s188, 4
          %s198 = int_to_ptr.vmem [resolvable:$true] %s197
          %203 = dma.hbm_to_vmem [thread:$0]  %s196, 1024, %s198, %s185, 192, 64, 4
        $region24: #{tpu_custom_call.1} parent=19 // pred_fallthru
          _
        // Predicated region
        $region25: #{tpu_custom_call.1} parent=19 // pred_check
          %p204 = pneg %p111
        $region26: #{tpu_custom_call.1} parent=19 // pred_check_branch
          %206 = sbr.rel (%p204) target = $region28
        $region27: #{tpu_custom_call.1} parent=19 // pred_region
          %p207 = scmp.lt.s32.totalorder %s24, 2
          %s208 = scalar_select %p207, %s24, 2
          %s209 = scalar_lea.vmem %s2, %s208
        $region28: #{tpu_custom_call.1} parent=19 // pred_fallthru
          _
      $region20: #{tpu_custom_call.1} parent=5 // pred_fallthru
        _
      %p210 = scmp.le.s32.totalorder 1, %s16
      %p211 = scmp.lt.s32.totalorder %s16, 4
      %p212 = pnand %p210, %p211
      %p213 = pneg %p212
      // Predicated region
      $region29: #{tpu_custom_call.1} parent=5 // pred_check
        _
      $region30: #{tpu_custom_call.1} parent=5 // pred_check_branch
        %215 = sbr.rel (%p212) target = $region32
      $region31: #{tpu_custom_call.1} parent=5 // pred_region
        %s216 = ssub.s32 %s16, 1
        // Predicated region
        $region33: #{tpu_custom_call.1} parent=31 // pred_check
          %p217 = pneg %p63
        $region34: #{tpu_custom_call.1} parent=31 // pred_check_branch
          %219 = sbr.rel (%p217) target = $region36
        $region35: #{tpu_custom_call.1} parent=31 // pred_region
          %220 = dma.done [#allocation4], 8192
        $region36: #{tpu_custom_call.1} parent=31 // pred_fallthru
          _
        %s221 = sand.u32 %s78, 1
        %s222 = scalar_lea.sflag [#allocation7], %s221
        %s223 = sand.u32 %s78, 1
        %s224 = smul.addr %s223, 64
        %s225 = scalar_lea.vmem [#allocation6], %s224
        // Predicated region
        $region37: #{tpu_custom_call.1} parent=31 // pred_check
          %p226 = pneg %p91
        $region38: #{tpu_custom_call.1} parent=31 // pred_check_branch
          %228 = sbr.rel (%p226) target = $region40
        $region39: #{tpu_custom_call.1} parent=31 // pred_region
          %229 = dma.done %s222, 1024
        $region40: #{tpu_custom_call.1} parent=31 // pred_fallthru
          _
        %p230 = pneg %p63
        %p231 = pneg %p60
        %s232 = sand.u32 %s78, 1
        %s233 = scalar_lea.sflag [#allocation7], %s232
        %s234 = sand.u32 %s78, 1
        %s235 = smul.addr %s234, 64
        %s236 = scalar_lea.vmem [#allocation6], %s235
        %p237 = pneg %p91
        %p238 = pneg %p88
        %p239 = scmp.lt.s32.totalorder %s27, 2
        %s240 = scalar_select %p239, %s27, 2
        %s241 = scalar_lea.vmem %s2, %s240
        %p242 = pneg %p117
        %p243 = pneg %p114
        %p244 = pneg %p145
        %p245 = pneg %p142
        %s246 = sand.u32 %s132, 1
        %s247 = scalar_lea.sflag [#allocation5], %s246
        %s248 = sand.u32 %s132, 1
        %s249 = smul.addr %s248, 256
        %s250 = scalar_lea.vmem [#allocation8], %s249
        %s251 = smul.u32 64, %s26
        %s252 = smul.u32 16, %s28
        %p253 = scmp.lt.s32.totalorder %s27, 2
        %s254 = scalar_select %p253, %s27, 2
        %s255 = scalar_lea.vmem %s2, %s254
        %s256 = smul.u32 64, %s26
        %p258 = scmp.eq.s32.totalorder %s28, 0
        // Predicated region
        $region41: #{tpu_custom_call.1} parent=31 // pred_check
          %p259 = pneg %p258
        $region42: #{tpu_custom_call.1} parent=31 // pred_check_branch
          %261 = sbr.rel (%p259) target = $region44
        $region43: #{tpu_custom_call.1} parent=31 // pred_region
          %262 = vst [vmem:[#allocation2] sm:$0xff] 0.0
          %263 = vst [vmem:[#allocation2 + $0x8] sm:$0xff] 0.0
          %264 = vst [vmem:[#allocation2 + $0x10] sm:$0xff] 0.0
          %265 = vst [vmem:[#allocation2 + $0x18] sm:$0xff] 0.0
          %266 = vst [vmem:[#allocation2 + $0x20] sm:$0xff] 0.0
          %267 = vst [vmem:[#allocation2 + $0x28] sm:$0xff] 0.0
          %268 = vst [vmem:[#allocation2 + $0x30] sm:$0xff] 0.0
          %269 = vst [vmem:[#allocation2 + $0x38] sm:$0xff] 0.0
          %270 = vst [vmem:[#allocation2 + $0x40] sm:$0xff] 0.0
          %271 = vst [vmem:[#allocation2 + $0x48] sm:$0xff] 0.0
          %272 = vst [vmem:[#allocation2 + $0x50] sm:$0xff] 0.0
          %273 = vst [vmem:[#allocation2 + $0x58] sm:$0xff] 0.0
          %274 = vst [vmem:[#allocation2 + $0x60] sm:$0xff] 0.0
          %275 = vst [vmem:[#allocation2 + $0x68] sm:$0xff] 0.0
          %276 = vst [vmem:[#allocation2 + $0x70] sm:$0xff] 0.0
          %277 = vst [vmem:[#allocation2 + $0x78] sm:$0xff] 0.0
          %278 = vst [vmem:[#allocation2 + $0x80] sm:$0xff] 0.0
          %279 = vst [vmem:[#allocation2 + $0x88] sm:$0xff] 0.0
          %280 = vst [vmem:[#allocation2 + $0x90] sm:$0xff] 0.0
          %281 = vst [vmem:[#allocation2 + $0x98] sm:$0xff] 0.0
          %282 = vst [vmem:[#allocation2 + $0xa0] sm:$0xff] 0.0
          %283 = vst [vmem:[#allocation2 + $0xa8] sm:$0xff] 0.0
          %284 = vst [vmem:[#allocation2 + $0xb0] sm:$0xff] 0.0
          %285 = vst [vmem:[#allocation2 + $0xb8] sm:$0xff] 0.0
          %286 = vst [vmem:[#allocation2 + $0xc0] sm:$0xff] 0.0
          %287 = vst [vmem:[#allocation2 + $0xc8] sm:$0xff] 0.0
          %288 = vst [vmem:[#allocation2 + $0xd0] sm:$0xff] 0.0
          %289 = vst [vmem:[#allocation2 + $0xd8] sm:$0xff] 0.0
          %290 = vst [vmem:[#allocation2 + $0xe0] sm:$0xff] 0.0
          %291 = vst [vmem:[#allocation2 + $0xe8] sm:$0xff] 0.0
          %292 = vst [vmem:[#allocation2 + $0xf0] sm:$0xff] 0.0
          %293 = vst [vmem:[#allocation2 + $0xf8] sm:$0xff] 0.0
          %294 = vst [vmem:[#allocation2 + $0x100] sm:$0xff] 0.0
          %295 = vst [vmem:[#allocation2 + $0x108] sm:$0xff] 0.0
          %296 = vst [vmem:[#allocation2 + $0x110] sm:$0xff] 0.0
          %297 = vst [vmem:[#allocation2 + $0x118] sm:$0xff] 0.0
          %298 = vst [vmem:[#allocation2 + $0x120] sm:$0xff] 0.0
          %299 = vst [vmem:[#allocation2 + $0x128] sm:$0xff] 0.0
          %300 = vst [vmem:[#allocation2 + $0x130] sm:$0xff] 0.0
          %301 = vst [vmem:[#allocation2 + $0x138] sm:$0xff] 0.0
          %302 = vst [vmem:[#allocation2 + $0x140] sm:$0xff] 0.0
          %303 = vst [vmem:[#allocation2 + $0x148] sm:$0xff] 0.0
          %304 = vst [vmem:[#allocation2 + $0x150] sm:$0xff] 0.0
          %305 = vst [vmem:[#allocation2 + $0x158] sm:$0xff] 0.0
          %306 = vst [vmem:[#allocation2 + $0x160] sm:$0xff] 0.0
          %307 = vst [vmem:[#allocation2 + $0x168] sm:$0xff] 0.0
          %308 = vst [vmem:[#allocation2 + $0x170] sm:$0xff] 0.0
          %309 = vst [vmem:[#allocation2 + $0x178] sm:$0xff] 0.0
          %310 = vst [vmem:[#allocation2 + $0x180] sm:$0xff] 0.0
          %311 = vst [vmem:[#allocation2 + $0x188] sm:$0xff] 0.0
          %312 = vst [vmem:[#allocation2 + $0x190] sm:$0xff] 0.0
          %313 = vst [vmem:[#allocation2 + $0x198] sm:$0xff] 0.0
          %314 = vst [vmem:[#allocation2 + $0x1a0] sm:$0xff] 0.0
          %315 = vst [vmem:[#allocation2 + $0x1a8] sm:$0xff] 0.0
          %316 = vst [vmem:[#allocation2 + $0x1b0] sm:$0xff] 0.0
          %317 = vst [vmem:[#allocation2 + $0x1b8] sm:$0xff] 0.0
          %318 = vst [vmem:[#allocation2 + $0x1c0] sm:$0xff] 0.0
          %319 = vst [vmem:[#allocation2 + $0x1c8] sm:$0xff] 0.0
          %320 = vst [vmem:[#allocation2 + $0x1d0] sm:$0xff] 0.0
          %321 = vst [vmem:[#allocation2 + $0x1d8] sm:$0xff] 0.0
          %322 = vst [vmem:[#allocation2 + $0x1e0] sm:$0xff] 0.0
          %323 = vst [vmem:[#allocation2 + $0x1e8] sm:$0xff] 0.0
          %324 = vst [vmem:[#allocation2 + $0x1f0] sm:$0xff] 0.0
          %325 = vst [vmem:[#allocation2 + $0x1f8] sm:$0xff] 0.0
        $region44: #{tpu_custom_call.1} parent=31 // pred_fallthru
          _
        %v326 = vld [vmem:[#allocation2] sm:$0xff]
        %v327 = vld [vmem:[#allocation2 + $0x8] sm:$0xff]
        %v328 = vld [vmem:[#allocation2 + $0x10] sm:$0xff]
        %v329 = vld [vmem:[#allocation2 + $0x18] sm:$0xff]
        %v330 = vld [vmem:[#allocation2 + $0x20] sm:$0xff]
        %v331 = vld [vmem:[#allocation2 + $0x28] sm:$0xff]
        %v332 = vld [vmem:[#allocation2 + $0x30] sm:$0xff]
        %v333 = vld [vmem:[#allocation2 + $0x38] sm:$0xff]
        %v334 = vld [vmem:[#allocation2 + $0x40] sm:$0xff]
        %v335 = vld [vmem:[#allocation2 + $0x48] sm:$0xff]
        %v336 = vld [vmem:[#allocation2 + $0x50] sm:$0xff]
        %v337 = vld [vmem:[#allocation2 + $0x58] sm:$0xff]
        %v338 = vld [vmem:[#allocation2 + $0x60] sm:$0xff]
        %v339 = vld [vmem:[#allocation2 + $0x68] sm:$0xff]
        %v340 = vld [vmem:[#allocation2 + $0x70] sm:$0xff]
        %v341 = vld [vmem:[#allocation2 + $0x78] sm:$0xff]
        %v342 = vld [vmem:[#allocation2 + $0x80] sm:$0xff]
        %v343 = vld [vmem:[#allocation2 + $0x88] sm:$0xff]
        %v344 = vld [vmem:[#allocation2 + $0x90] sm:$0xff]
        %v345 = vld [vmem:[#allocation2 + $0x98] sm:$0xff]
        %v346 = vld [vmem:[#allocation2 + $0xa0] sm:$0xff]
        %v347 = vld [vmem:[#allocation2 + $0xa8] sm:$0xff]
        %v348 = vld [vmem:[#allocation2 + $0xb0] sm:$0xff]
        %v349 = vld [vmem:[#allocation2 + $0xb8] sm:$0xff]
        %v350 = vld [vmem:[#allocation2 + $0xc0] sm:$0xff]
        %v351 = vld [vmem:[#allocation2 + $0xc8] sm:$0xff]
        %v352 = vld [vmem:[#allocation2 + $0xd0] sm:$0xff]
        %v353 = vld [vmem:[#allocation2 + $0xd8] sm:$0xff]
        %v354 = vld [vmem:[#allocation2 + $0xe0] sm:$0xff]
        %v355 = vld [vmem:[#allocation2 + $0xe8] sm:$0xff]
        %v356 = vld [vmem:[#allocation2 + $0xf0] sm:$0xff]
        %v357 = vld [vmem:[#allocation2 + $0xf8] sm:$0xff]
        %v358 = vld [vmem:[#allocation2 + $0x100] sm:$0xff]
        %v359 = vld [vmem:[#allocation2 + $0x108] sm:$0xff]
        %v360 = vld [vmem:[#allocation2 + $0x110] sm:$0xff]
        %v361 = vld [vmem:[#allocation2 + $0x118] sm:$0xff]
        %v362 = vld [vmem:[#allocation2 + $0x120] sm:$0xff]
        %v363 = vld [vmem:[#allocation2 + $0x128] sm:$0xff]
        %v364 = vld [vmem:[#allocation2 + $0x130] sm:$0xff]
        %v365 = vld [vmem:[#allocation2 + $0x138] sm:$0xff]
        %v366 = vld [vmem:[#allocation2 + $0x140] sm:$0xff]
        %v367 = vld [vmem:[#allocation2 + $0x148] sm:$0xff]
        %v368 = vld [vmem:[#allocation2 + $0x150] sm:$0xff]
        %v369 = vld [vmem:[#allocation2 + $0x158] sm:$0xff]
        %v370 = vld [vmem:[#allocation2 + $0x160] sm:$0xff]
        %v371 = vld [vmem:[#allocation2 + $0x168] sm:$0xff]
        %v372 = vld [vmem:[#allocation2 + $0x170] sm:$0xff]
        %v373 = vld [vmem:[#allocation2 + $0x178] sm:$0xff]
        %v374 = vld [vmem:[#allocation2 + $0x180] sm:$0xff]
        %v375 = vld [vmem:[#allocation2 + $0x188] sm:$0xff]
        %v376 = vld [vmem:[#allocation2 + $0x190] sm:$0xff]
        %v377 = vld [vmem:[#allocation2 + $0x198] sm:$0xff]
        %v378 = vld [vmem:[#allocation2 + $0x1a0] sm:$0xff]
        %v379 = vld [vmem:[#allocation2 + $0x1a8] sm:$0xff]
        %v380 = vld [vmem:[#allocation2 + $0x1b0] sm:$0xff]
        %v381 = vld [vmem:[#allocation2 + $0x1b8] sm:$0xff]
        %v382 = vld [vmem:[#allocation2 + $0x1c0] sm:$0xff]
        %v383 = vld [vmem:[#allocation2 + $0x1c8] sm:$0xff]
        %v384 = vld [vmem:[#allocation2 + $0x1d0] sm:$0xff]
        %v385 = vld [vmem:[#allocation2 + $0x1d8] sm:$0xff]
        %v386 = vld [vmem:[#allocation2 + $0x1e0] sm:$0xff]
        %v387 = vld [vmem:[#allocation2 + $0x1e8] sm:$0xff]
        %v388 = vld [vmem:[#allocation2 + $0x1f0] sm:$0xff]
        %v389 = vld [vmem:[#allocation2 + $0x1f8] sm:$0xff]
        %v390 = vld [vmem:[#allocation3] sm:$0xff]
        %v391 = vld [vmem:[#allocation3 + $0x8] sm:$0xff]
        %v392 = vld [vmem:[#allocation3 + $0x10] sm:$0xff]
        %v393 = vld [vmem:[#allocation3 + $0x18] sm:$0xff]
        %v394 = vld [vmem:[#allocation3 + $0x20] sm:$0xff]
        %v395 = vld [vmem:[#allocation3 + $0x28] sm:$0xff]
        %v396 = vld [vmem:[#allocation3 + $0x30] sm:$0xff]
        %v397 = vld [vmem:[#allocation3 + $0x38] sm:$0xff]
        %v398 = vld [vmem:[#allocation3 + $0x40] sm:$0xff]
        %v399 = vld [vmem:[#allocation3 + $0x48] sm:$0xff]
        %v400 = vld [vmem:[#allocation3 + $0x50] sm:$0xff]
        %v401 = vld [vmem:[#allocation3 + $0x58] sm:$0xff]
        %v402 = vld [vmem:[#allocation3 + $0x60] sm:$0xff]
        %v403 = vld [vmem:[#allocation3 + $0x68] sm:$0xff]
        %v404 = vld [vmem:[#allocation3 + $0x70] sm:$0xff]
        %v405 = vld [vmem:[#allocation3 + $0x78] sm:$0xff]
        %v406 = vld [vmem:[#allocation3 + $0x80] sm:$0xff]
        %v407 = vld [vmem:[#allocation3 + $0x88] sm:$0xff]
        %v408 = vld [vmem:[#allocation3 + $0x90] sm:$0xff]
        %v409 = vld [vmem:[#allocation3 + $0x98] sm:$0xff]
        %v410 = vld [vmem:[#allocation3 + $0xa0] sm:$0xff]
        %v411 = vld [vmem:[#allocation3 + $0xa8] sm:$0xff]
        %v412 = vld [vmem:[#allocation3 + $0xb0] sm:$0xff]
        %v413 = vld [vmem:[#allocation3 + $0xb8] sm:$0xff]
        %v414 = vld [vmem:[#allocation3 + $0xc0] sm:$0xff]
        %v415 = vld [vmem:[#allocation3 + $0xc8] sm:$0xff]
        %v416 = vld [vmem:[#allocation3 + $0xd0] sm:$0xff]
        %v417 = vld [vmem:[#allocation3 + $0xd8] sm:$0xff]
        %v418 = vld [vmem:[#allocation3 + $0xe0] sm:$0xff]
        %v419 = vld [vmem:[#allocation3 + $0xe8] sm:$0xff]
        %v420 = vld [vmem:[#allocation3 + $0xf0] sm:$0xff]
        %v421 = vld [vmem:[#allocation3 + $0xf8] sm:$0xff]
        %v422 = vld [vmem:[#allocation3 + $0x100] sm:$0xff]
        %v423 = vld [vmem:[#allocation3 + $0x108] sm:$0xff]
        %v424 = vld [vmem:[#allocation3 + $0x110] sm:$0xff]
        %v425 = vld [vmem:[#allocation3 + $0x118] sm:$0xff]
        %v426 = vld [vmem:[#allocation3 + $0x120] sm:$0xff]
        %v427 = vld [vmem:[#allocation3 + $0x128] sm:$0xff]
        %v428 = vld [vmem:[#allocation3 + $0x130] sm:$0xff]
        %v429 = vld [vmem:[#allocation3 + $0x138] sm:$0xff]
        %v430 = vld [vmem:[#allocation3 + $0x140] sm:$0xff]
        %v431 = vld [vmem:[#allocation3 + $0x148] sm:$0xff]
        %v432 = vld [vmem:[#allocation3 + $0x150] sm:$0xff]
        %v433 = vld [vmem:[#allocation3 + $0x158] sm:$0xff]
        %v434 = vld [vmem:[#allocation3 + $0x160] sm:$0xff]
        %v435 = vld [vmem:[#allocation3 + $0x168] sm:$0xff]
        %v436 = vld [vmem:[#allocation3 + $0x170] sm:$0xff]
        %v437 = vld [vmem:[#allocation3 + $0x178] sm:$0xff]
        %v438 = vld [vmem:[#allocation3 + $0x180] sm:$0xff]
        %v439 = vld [vmem:[#allocation3 + $0x188] sm:$0xff]
        %v440 = vld [vmem:[#allocation3 + $0x190] sm:$0xff]
        %v441 = vld [vmem:[#allocation3 + $0x198] sm:$0xff]
        %v442 = vld [vmem:[#allocation3 + $0x1a0] sm:$0xff]
        %v443 = vld [vmem:[#allocation3 + $0x1a8] sm:$0xff]
        %v444 = vld [vmem:[#allocation3 + $0x1b0] sm:$0xff]
        %v445 = vld [vmem:[#allocation3 + $0x1b8] sm:$0xff]
        %v446 = vld [vmem:[#allocation3 + $0x1c0] sm:$0xff]
        %v447 = vld [vmem:[#allocation3 + $0x1c8] sm:$0xff]
        %v448 = vld [vmem:[#allocation3 + $0x1d0] sm:$0xff]
        %v449 = vld [vmem:[#allocation3 + $0x1d8] sm:$0xff]
        %v450 = vld [vmem:[#allocation3 + $0x1e0] sm:$0xff]
        %v451 = vld [vmem:[#allocation3 + $0x1e8] sm:$0xff]
        %v452 = vld [vmem:[#allocation3 + $0x1f0] sm:$0xff]
        %v453 = vld [vmem:[#allocation3 + $0x1f8] sm:$0xff]
        %v454 = vpack.c.bf16 %v391, %v390
        %v455 = vpack.c.bf16 %v393, %v392
        %v456 = vpack.c.bf16 %v395, %v394
        %v457 = vpack.c.bf16 %v397, %v396
        %v458 = vpack.c.bf16 %v399, %v398
        %v459 = vpack.c.bf16 %v401, %v400
        %v460 = vpack.c.bf16 %v403, %v402
        %v461 = vpack.c.bf16 %v405, %v404
        %v462 = vpack.c.bf16 %v407, %v406
        %v463 = vpack.c.bf16 %v409, %v408
        %v464 = vpack.c.bf16 %v411, %v410
        %v465 = vpack.c.bf16 %v413, %v412
        %v466 = vpack.c.bf16 %v415, %v414
        %v467 = vpack.c.bf16 %v417, %v416
        %v468 = vpack.c.bf16 %v419, %v418
        %v469 = vpack.c.bf16 %v421, %v420
        %v470 = vpack.c.bf16 %v423, %v422
        %v471 = vpack.c.bf16 %v425, %v424
        %v472 = vpack.c.bf16 %v427, %v426
        %v473 = vpack.c.bf16 %v429, %v428
        %v474 = vpack.c.bf16 %v431, %v430
        %v475 = vpack.c.bf16 %v433, %v432
        %v476 = vpack.c.bf16 %v435, %v434
        %v477 = vpack.c.bf16 %v437, %v436
        %v478 = vpack.c.bf16 %v439, %v438
        %v479 = vpack.c.bf16 %v441, %v440
        %v480 = vpack.c.bf16 %v443, %v442
        %v481 = vpack.c.bf16 %v445, %v444
        %v482 = vpack.c.bf16 %v447, %v446
        %v483 = vpack.c.bf16 %v449, %v448
        %v484 = vpack.c.bf16 %v451, %v450
        %v485 = vpack.c.bf16 %v453, %v452
        %v486 = vld [vmem:[%s225] sm:$0xf]
        %v487 = vld [vmem:[%s225 + $0x4] sm:$0xf]
        %v488 = vld [vmem:[%s225 + $0x8] sm:$0xf]
        %v489 = vld [vmem:[%s225 + $0xc] sm:$0xf]
        %v490 = vld [vmem:[%s225 + $0x10] sm:$0xf]
        %v491 = vld [vmem:[%s225 + $0x14] sm:$0xf]
        %v492 = vld [vmem:[%s225 + $0x18] sm:$0xf]
        %v493 = vld [vmem:[%s225 + $0x1c] sm:$0xf]
        %v494 = vld [vmem:[%s225 + $0x20] sm:$0xf]
        %v495 = vld [vmem:[%s225 + $0x24] sm:$0xf]
        %v496 = vld [vmem:[%s225 + $0x28] sm:$0xf]
        %v497 = vld [vmem:[%s225 + $0x2c] sm:$0xf]
        %v498 = vld [vmem:[%s225 + $0x30] sm:$0xf]
        %v499 = vld [vmem:[%s225 + $0x34] sm:$0xf]
        %v500 = vld [vmem:[%s225 + $0x38] sm:$0xf]
        %v501 = vld [vmem:[%s225 + $0x3c] sm:$0xf]
        %v518 = vunpack.c.l.b16 %v486
        %v519 = vunpack.c.l.b16 %v487
        %v520 = vunpack.c.l.b16 %v488
        %v521 = vunpack.c.l.b16 %v489
        %v522 = vunpack.c.l.b16 %v490
        %v523 = vunpack.c.l.b16 %v491
        %v524 = vunpack.c.l.b16 %v492
        %v525 = vunpack.c.l.b16 %v493
        %v526 = vunpack.c.l.b16 %v494
        %v527 = vunpack.c.l.b16 %v495
        %v528 = vunpack.c.l.b16 %v496
        %v529 = vunpack.c.l.b16 %v497
        %v530 = vunpack.c.l.b16 %v498
        %v531 = vunpack.c.l.b16 %v499
        %v532 = vunpack.c.l.b16 %v500
        %v533 = vunpack.c.l.b16 %v501
        %v534 = vpack.c.b16 %v519, %v518
        %v535 = vpack.c.b16 %v521, %v520
        %v536 = vpack.c.b16 %v523, %v522
        %v537 = vpack.c.b16 %v525, %v524
        %v538 = vpack.c.b16 %v527, %v526
        %v539 = vpack.c.b16 %v529, %v528
        %v540 = vpack.c.b16 %v531, %v530
        %v541 = vpack.c.b16 %v533, %v532
        %550 = vmatprep.subr.bf16.mxu0 0
        %551 = vmatpush1.bf16.msra.mxu0 %v534
        %552 = vmatprep.subr.bf16.mxu0 0
        %553 = vmatpush1.bf16.msra.mxu0 %v535
        %554 = vmatprep.subr.bf16.mxu0 0
        %555 = vmatpush1.bf16.msra.mxu0 %v536
        %556 = vmatprep.subr.bf16.mxu0 0
        %557 = vmatpush1.bf16.msra.mxu0 %v537
        %558 = vmatprep.subr.bf16.mxu0 0
        %559 = vmatpush1.bf16.msra.mxu0 %v538
        %560 = vmatprep.subr.bf16.mxu0 0
        %561 = vmatpush1.bf16.msra.mxu0 %v539
        %562 = vmatprep.subr.bf16.mxu0 0
        %563 = vmatpush1.bf16.msra.mxu0 %v540
        %564 = vmatprep.subr.bf16.mxu0 0
        %565 = vmatpush1.bf16.msra.mxu0 %v541
        %566 = vmatprep.subr.bf16.mxu0 0
        %567 = vmatpush1.bf16.msra.mxu0 0
        %568 = vmatprep.subr.bf16.mxu0 0
        %569 = vmatpush1.bf16.msra.mxu0 0
        %570 = vmatprep.subr.bf16.mxu0 0
        %571 = vmatpush1.bf16.msra.mxu0 0
        %572 = vmatprep.subr.bf16.mxu0 0
        %573 = vmatpush1.bf16.msra.mxu0 0
        %574 = vmatprep.subr.bf16.mxu0 0
        %575 = vmatpush1.bf16.msra.mxu0 0
        %576 = vmatprep.subr.bf16.mxu0 0
        %577 = vmatpush1.bf16.msra.mxu0 0
        %578 = vmatprep.subr.bf16.mxu0 0
        %579 = vmatpush1.bf16.msra.mxu0 0
        %580 = vmatprep.subr.bf16.mxu0 0
        %581 = vmatpush1.bf16.msra.mxu0 0
        %582 = vmatprep.mubr.bf16.mxu0 0
        %583 = vmatmul.mubr.bf16.gmra.mrb[0].mxu0 %v454
        %v584 = vpop.f32.mrb[0].mxu0
        %v585 = vadd.f32 0.0, %v584
        %v586 = vpop.f32.mrb[0].mxu0
        %v587 = vpop.f32.mrb[0].mxu0
        %v588 = vadd.f32 0.0, %v587
        %v589 = vpop.f32.mrb[0].mxu0
        %590 = vmatprep.mubr.bf16.mxu0 0
        %591 = vmatmul.mubr.bf16.gmra.mrb[0].mxu0 %v455
        %v592 = vpop.f32.mrb[0].mxu0
        %v593 = vadd.f32 0.0, %v592
        %v594 = vpop.f32.mrb[0].mxu0
        %v595 = vpop.f32.mrb[0].mxu0
        %v596 = vadd.f32 0.0, %v595
        %v597 = vpop.f32.mrb[0].mxu0
        %598 = vmatprep.mubr.bf16.mxu0 0
        %599 = vmatmul.mubr.bf16.gmra.mrb[0].mxu0 %v456
        %v600 = vpop.f32.mrb[0].mxu0
        %v601 = vadd.f32 0.0, %v600
        %v602 = vpop.f32.mrb[0].mxu0
        %v603 = vpop.f32.mrb[0].mxu0
        %v604 = vadd.f32 0.0, %v603
        %v605 = vpop.f32.mrb[0].mxu0
        %606 = vmatprep.mubr.bf16.mxu0 0
        %607 = vmatmul.mubr.bf16.gmra.mrb[0].mxu0 %v457
        %v608 = vpop.f32.mrb[0].mxu0
        %v609 = vadd.f32 0.0, %v608
        %v610 = vpop.f32.mrb[0].mxu0
        %v611 = vpop.f32.mrb[0].mxu0
        %v612 = vadd.f32 0.0, %v611
        %v613 = vpop.f32.mrb[0].mxu0
        %614 = vmatprep.mubr.bf16.mxu0 0
        %615 = vmatmul.mubr.bf16.gmra.mrb[0].mxu0 %v458
        %v616 = vpop.f32.mrb[0].mxu0
        %v617 = vadd.f32 0.0, %v616
        %v618 = vpop.f32.mrb[0].mxu0
        %v619 = vpop.f32.mrb[0].mxu0
        %v620 = vadd.f32 0.0, %v619
        %v621 = vpop.f32.mrb[0].mxu0
        %622 = vmatprep.mubr.bf16.mxu0 0
        %623 = vmatmul.mubr.bf16.gmra.mrb[0].mxu0 %v459
        %v624 = vpop.f32.mrb[0].mxu0
        %v625 = vadd.f32 0.0, %v624
        %v626 = vpop.f32.mrb[0].mxu0
        %v627 = vpop.f32.mrb[0].mxu0
        %v628 = vadd.f32 0.0, %v627
        %v629 = vpop.f32.mrb[0].mxu0
        %630 = vmatprep.mubr.bf16.mxu0 0
        %631 = vmatmul.mubr.bf16.gmra.mrb[0].mxu0 %v460
        %v632 = vpop.f32.mrb[0].mxu0
        %v633 = vadd.f32 0.0, %v632
        %v634 = vpop.f32.mrb[0].mxu0
        %v635 = vpop.f32.mrb[0].mxu0
        %v636 = vadd.f32 0.0, %v635
        %v637 = vpop.f32.mrb[0].mxu0
        %638 = vmatprep.mubr.bf16.mxu0 0
        %639 = vmatmul.mubr.bf16.gmra.mrb[0].mxu0 %v461
        %v640 = vpop.f32.mrb[0].mxu0
        %v641 = vadd.f32 0.0, %v640
        %v642 = vpop.f32.mrb[0].mxu0
        %v643 = vpop.f32.mrb[0].mxu0
        %v644 = vadd.f32 0.0, %v643
        %v645 = vpop.f32.mrb[0].mxu0
        %646 = vmatprep.mubr.bf16.mxu0 0
        %647 = vmatmul.mubr.bf16.gmra.mrb[0].mxu0 %v462
        %v648 = vpop.f32.mrb[0].mxu0
        %v649 = vadd.f32 0.0, %v648
        %v650 = vpop.f32.mrb[0].mxu0
        %v651 = vpop.f32.mrb[0].mxu0
        %v652 = vadd.f32 0.0, %v651
        %v653 = vpop.f32.mrb[0].mxu0
        %654 = vmatprep.mubr.bf16.mxu0 0
        %655 = vmatmul.mubr.bf16.gmra.mrb[0].mxu0 %v463
        %v656 = vpop.f32.mrb[0].mxu0
        %v657 = vadd.f32 0.0, %v656
        %v658 = vpop.f32.mrb[0].mxu0
        %v659 = vpop.f32.mrb[0].mxu0
        %v660 = vadd.f32 0.0, %v659
        %v661 = vpop.f32.mrb[0].mxu0
        %662 = vmatprep.mubr.bf16.mxu0 0
        %663 = vmatmul.mubr.bf16.gmra.mrb[0].mxu0 %v464
        %v664 = vpop.f32.mrb[0].mxu0
        %v665 = vadd.f32 0.0, %v664
        %v666 = vpop.f32.mrb[0].mxu0
        %v667 = vpop.f32.mrb[0].mxu0
        %v668 = vadd.f32 0.0, %v667
        %v669 = vpop.f32.mrb[0].mxu0
        %670 = vmatprep.mubr.bf16.mxu0 0
        %671 = vmatmul.mubr.bf16.gmra.mrb[0].mxu0 %v465
        %v672 = vpop.f32.mrb[0].mxu0
        %v673 = vadd.f32 0.0, %v672
        %v674 = vpop.f32.mrb[0].mxu0
        %v675 = vpop.f32.mrb[0].mxu0
        %v676 = vadd.f32 0.0, %v675
        %v677 = vpop.f32.mrb[0].mxu0
        %678 = vmatprep.mubr.bf16.mxu0 0
        %679 = vmatmul.mubr.bf16.gmra.mrb[0].mxu0 %v466
        %v680 = vpop.f32.mrb[0].mxu0
        %v681 = vadd.f32 0.0, %v680
        %v682 = vpop.f32.mrb[0].mxu0
        %v683 = vpop.f32.mrb[0].mxu0
        %v684 = vadd.f32 0.0, %v683
        %v685 = vpop.f32.mrb[0].mxu0
        %686 = vmatprep.mubr.bf16.mxu0 0
        %687 = vmatmul.mubr.bf16.gmra.mrb[0].mxu0 %v467
        %v688 = vpop.f32.mrb[0].mxu0
        %v689 = vadd.f32 0.0, %v688
        %v690 = vpop.f32.mrb[0].mxu0
        %v691 = vpop.f32.mrb[0].mxu0
        %v692 = vadd.f32 0.0, %v691
        %v693 = vpop.f32.mrb[0].mxu0
        %694 = vmatprep.mubr.bf16.mxu0 0
        %695 = vmatmul.mubr.bf16.gmra.mrb[0].mxu0 %v468
        %v696 = vpop.f32.mrb[0].mxu0
        %v697 = vadd.f32 0.0, %v696
        %v698 = vpop.f32.mrb[0].mxu0
        %v699 = vpop.f32.mrb[0].mxu0
        %v700 = vadd.f32 0.0, %v699
        %v701 = vpop.f32.mrb[0].mxu0
        %702 = vmatprep.mubr.bf16.mxu0 0
        %703 = vmatmul.mubr.bf16.gmra.mrb[0].mxu0 %v469
        %v704 = vpop.f32.mrb[0].mxu0
        %v705 = vadd.f32 0.0, %v704
        %v706 = vpop.f32.mrb[0].mxu0
        %v707 = vpop.f32.mrb[0].mxu0
        %v708 = vadd.f32 0.0, %v707
        %v709 = vpop.f32.mrb[0].mxu0
        %710 = vmatprep.mubr.bf16.mxu0 0
        %711 = vmatmul.mubr.bf16.gmra.mrb[0].mxu0 %v470
        %v712 = vpop.f32.mrb[0].mxu0
        %v713 = vadd.f32 0.0, %v712
        %v714 = vpop.f32.mrb[0].mxu0
        %v715 = vpop.f32.mrb[0].mxu0
        %v716 = vadd.f32 0.0, %v715
        %v717 = vpop.f32.mrb[0].mxu0
        %718 = vmatprep.mubr.bf16.mxu0 0
        %719 = vmatmul.mubr.bf16.gmra.mrb[0].mxu0 %v471
        %v720 = vpop.f32.mrb[0].mxu0
        %v721 = vadd.f32 0.0, %v720
        %v722 = vpop.f32.mrb[0].mxu0
        %v723 = vpop.f32.mrb[0].mxu0
        %v724 = vadd.f32 0.0, %v723
        %v725 = vpop.f32.mrb[0].mxu0
        %726 = vmatprep.mubr.bf16.mxu0 0
        %727 = vmatmul.mubr.bf16.gmra.mrb[0].mxu0 %v472
        %v728 = vpop.f32.mrb[0].mxu0
        %v729 = vadd.f32 0.0, %v728
        %v730 = vpop.f32.mrb[0].mxu0
        %v731 = vpop.f32.mrb[0].mxu0
        %v732 = vadd.f32 0.0, %v731
        %v733 = vpop.f32.mrb[0].mxu0
        %734 = vmatprep.mubr.bf16.mxu0 0
        %735 = vmatmul.mubr.bf16.gmra.mrb[0].mxu0 %v473
        %v736 = vpop.f32.mrb[0].mxu0
        %v737 = vadd.f32 0.0, %v736
        %v738 = vpop.f32.mrb[0].mxu0
        %v739 = vpop.f32.mrb[0].mxu0
        %v740 = vadd.f32 0.0, %v739
        %v741 = vpop.f32.mrb[0].mxu0
        %742 = vmatprep.mubr.bf16.mxu0 0
        %743 = vmatmul.mubr.bf16.gmra.mrb[0].mxu0 %v474
        %v744 = vpop.f32.mrb[0].mxu0
        %v745 = vadd.f32 0.0, %v744
        %v746 = vpop.f32.mrb[0].mxu0
        %v747 = vpop.f32.mrb[0].mxu0
        %v748 = vadd.f32 0.0, %v747
        %v749 = vpop.f32.mrb[0].mxu0
        %750 = vmatprep.mubr.bf16.mxu0 0
        %751 = vmatmul.mubr.bf16.gmra.mrb[0].mxu0 %v475
        %v752 = vpop.f32.mrb[0].mxu0
        %v753 = vadd.f32 0.0, %v752
        %v754 = vpop.f32.mrb[0].mxu0
        %v755 = vpop.f32.mrb[0].mxu0
        %v756 = vadd.f32 0.0, %v755
        %v757 = vpop.f32.mrb[0].mxu0
        %758 = vmatprep.mubr.bf16.mxu0 0
        %759 = vmatmul.mubr.bf16.gmra.mrb[0].mxu0 %v476
        %v760 = vpop.f32.mrb[0].mxu0
        %v761 = vadd.f32 0.0, %v760
        %v762 = vpop.f32.mrb[0].mxu0
        %v763 = vpop.f32.mrb[0].mxu0
        %v764 = vadd.f32 0.0, %v763
        %v765 = vpop.f32.mrb[0].mxu0
        %766 = vmatprep.mubr.bf16.mxu0 0
        %767 = vmatmul.mubr.bf16.gmra.mrb[0].mxu0 %v477
        %v768 = vpop.f32.mrb[0].mxu0
        %v769 = vadd.f32 0.0, %v768
        %v770 = vpop.f32.mrb[0].mxu0
        %v771 = vpop.f32.mrb[0].mxu0
        %v772 = vadd.f32 0.0, %v771
        %v773 = vpop.f32.mrb[0].mxu0
        %774 = vmatprep.mubr.bf16.mxu0 0
        %775 = vmatmul.mubr.bf16.gmra.mrb[0].mxu0 %v478
        %v776 = vpop.f32.mrb[0].mxu0
        %v777 = vadd.f32 0.0, %v776
        %v778 = vpop.f32.mrb[0].mxu0
        %v779 = vpop.f32.mrb[0].mxu0
        %v780 = vadd.f32 0.0, %v779
        %v781 = vpop.f32.mrb[0].mxu0
        %782 = vmatprep.mubr.bf16.mxu0 0
        %783 = vmatmul.mubr.bf16.gmra.mrb[0].mxu0 %v479
        %v784 = vpop.f32.mrb[0].mxu0
        %v785 = vadd.f32 0.0, %v784
        %v786 = vpop.f32.mrb[0].mxu0
        %v787 = vpop.f32.mrb[0].mxu0
        %v788 = vadd.f32 0.0, %v787
        %v789 = vpop.f32.mrb[0].mxu0
        %790 = vmatprep.mubr.bf16.mxu0 0
        %791 = vmatmul.mubr.bf16.gmra.mrb[0].mxu0 %v480
        %v792 = vpop.f32.mrb[0].mxu0
        %v793 = vadd.f32 0.0, %v792
        %v794 = vpop.f32.mrb[0].mxu0
        %v795 = vpop.f32.mrb[0].mxu0
        %v796 = vadd.f32 0.0, %v795
        %v797 = vpop.f32.mrb[0].mxu0
        %798 = vmatprep.mubr.bf16.mxu0 0
        %799 = vmatmul.mubr.bf16.gmra.mrb[0].mxu0 %v481
        %v800 = vpop.f32.mrb[0].mxu0
        %v801 = vadd.f32 0.0, %v800
        %v802 = vpop.f32.mrb[0].mxu0
        %v803 = vpop.f32.mrb[0].mxu0
        %v804 = vadd.f32 0.0, %v803
        %v805 = vpop.f32.mrb[0].mxu0
        %806 = vmatprep.mubr.bf16.mxu0 0
        %807 = vmatmul.mubr.bf16.gmra.mrb[0].mxu0 %v482
        %v808 = vpop.f32.mrb[0].mxu0
        %v809 = vadd.f32 0.0, %v808
        %v810 = vpop.f32.mrb[0].mxu0
        %v811 = vpop.f32.mrb[0].mxu0
        %v812 = vadd.f32 0.0, %v811
        %v813 = vpop.f32.mrb[0].mxu0
        %814 = vmatprep.mubr.bf16.mxu0 0
        %815 = vmatmul.mubr.bf16.gmra.mrb[0].mxu0 %v483
        %v816 = vpop.f32.mrb[0].mxu0
        %v817 = vadd.f32 0.0, %v816
        %v818 = vpop.f32.mrb[0].mxu0
        %v819 = vpop.f32.mrb[0].mxu0
        %v820 = vadd.f32 0.0, %v819
        %v821 = vpop.f32.mrb[0].mxu0
        %822 = vmatprep.mubr.bf16.mxu0 0
        %823 = vmatmul.mubr.bf16.gmra.mrb[0].mxu0 %v484
        %v824 = vpop.f32.mrb[0].mxu0
        %v825 = vadd.f32 0.0, %v824
        %v826 = vpop.f32.mrb[0].mxu0
        %v827 = vpop.f32.mrb[0].mxu0
        %v828 = vadd.f32 0.0, %v827
        %v829 = vpop.f32.mrb[0].mxu0
        %830 = vmatprep.mubr.bf16.mxu0 0
        %831 = vmatmul.mubr.bf16.gmra.mrb[0].mxu0 %v485
        %v832 = vpop.f32.mrb[0].mxu0
        %v833 = vadd.f32 0.0, %v832
        %v834 = vpop.f32.mrb[0].mxu0
        %v835 = vpop.f32.mrb[0].mxu0
        %v836 = vadd.f32 0.0, %v835
        %v837 = vpop.f32.mrb[0].mxu0
        %838 = vdwg.mxu0
        %v839 = vadd.f32 %v326, %v585
        %v840 = vadd.f32 %v327, %v588
        %v841 = vadd.f32 %v328, %v593
        %v842 = vadd.f32 %v329, %v596
        %v843 = vadd.f32 %v330, %v601
        %v844 = vadd.f32 %v331, %v604
        %v845 = vadd.f32 %v332, %v609
        %v846 = vadd.f32 %v333, %v612
        %v847 = vadd.f32 %v334, %v617
        %v848 = vadd.f32 %v335, %v620
        %v849 = vadd.f32 %v336, %v625
        %v850 = vadd.f32 %v337, %v628
        %v851 = vadd.f32 %v338, %v633
        %v852 = vadd.f32 %v339, %v636
        %v853 = vadd.f32 %v340, %v641
        %v854 = vadd.f32 %v341, %v644
        %v855 = vadd.f32 %v342, %v649
        %v856 = vadd.f32 %v343, %v652
        %v857 = vadd.f32 %v344, %v657
        %v858 = vadd.f32 %v345, %v660
        %v859 = vadd.f32 %v346, %v665
        %v860 = vadd.f32 %v347, %v668
        %v861 = vadd.f32 %v348, %v673
        %v862 = vadd.f32 %v349, %v676
        %v863 = vadd.f32 %v350, %v681
        %v864 = vadd.f32 %v351, %v684
        %v865 = vadd.f32 %v352, %v689
        %v866 = vadd.f32 %v353, %v692
        %v867 = vadd.f32 %v354, %v697
        %v868 = vadd.f32 %v355, %v700
        %v869 = vadd.f32 %v356, %v705
        %v870 = vadd.f32 %v357, %v708
        %v871 = vadd.f32 %v358, %v713
        %v872 = vadd.f32 %v359, %v716
        %v873 = vadd.f32 %v360, %v721
        %v874 = vadd.f32 %v361, %v724
        %v875 = vadd.f32 %v362, %v729
        %v876 = vadd.f32 %v363, %v732
        %v877 = vadd.f32 %v364, %v737
        %v878 = vadd.f32 %v365, %v740
        %v879 = vadd.f32 %v366, %v745
        %v880 = vadd.f32 %v367, %v748
        %v881 = vadd.f32 %v368, %v753
        %v882 = vadd.f32 %v369, %v756
        %v883 = vadd.f32 %v370, %v761
        %v884 = vadd.f32 %v371, %v764
        %v885 = vadd.f32 %v372, %v769
        %v886 = vadd.f32 %v373, %v772
        %v887 = vadd.f32 %v374, %v777
        %v888 = vadd.f32 %v375, %v780
        %v889 = vadd.f32 %v376, %v785
        %v890 = vadd.f32 %v377, %v788
        %v891 = vadd.f32 %v378, %v793
        %v892 = vadd.f32 %v379, %v796
        %v893 = vadd.f32 %v380, %v801
        %v894 = vadd.f32 %v381, %v804
        %v895 = vadd.f32 %v382, %v809
        %v896 = vadd.f32 %v383, %v812
        %v897 = vadd.f32 %v384, %v817
        %v898 = vadd.f32 %v385, %v820
        %v899 = vadd.f32 %v386, %v825
        %v900 = vadd.f32 %v387, %v828
        %v901 = vadd.f32 %v388, %v833
        %v902 = vadd.f32 %v389, %v836
        %903 = vst [vmem:[#allocation2] sm:$0xff] %v839
        %904 = vst [vmem:[#allocation2 + $0x8] sm:$0xff] %v840
        %905 = vst [vmem:[#allocation2 + $0x10] sm:$0xff] %v841
        %906 = vst [vmem:[#allocation2 + $0x18] sm:$0xff] %v842
        %907 = vst [vmem:[#allocation2 + $0x20] sm:$0xff] %v843
        %908 = vst [vmem:[#allocation2 + $0x28] sm:$0xff] %v844
        %909 = vst [vmem:[#allocation2 + $0x30] sm:$0xff] %v845
        %910 = vst [vmem:[#allocation2 + $0x38] sm:$0xff] %v846
        %911 = vst [vmem:[#allocation2 + $0x40] sm:$0xff] %v847
        %912 = vst [vmem:[#allocation2 + $0x48] sm:$0xff] %v848
        %913 = vst [vmem:[#allocation2 + $0x50] sm:$0xff] %v849
        %914 = vst [vmem:[#allocation2 + $0x58] sm:$0xff] %v850
        %915 = vst [vmem:[#allocation2 + $0x60] sm:$0xff] %v851
        %916 = vst [vmem:[#allocation2 + $0x68] sm:$0xff] %v852
        %917 = vst [vmem:[#allocation2 + $0x70] sm:$0xff] %v853
        %918 = vst [vmem:[#allocation2 + $0x78] sm:$0xff] %v854
        %919 = vst [vmem:[#allocation2 + $0x80] sm:$0xff] %v855
        %920 = vst [vmem:[#allocation2 + $0x88] sm:$0xff] %v856
        %921 = vst [vmem:[#allocation2 + $0x90] sm:$0xff] %v857
        %922 = vst [vmem:[#allocation2 + $0x98] sm:$0xff] %v858
        %923 = vst [vmem:[#allocation2 + $0xa0] sm:$0xff] %v859
        %924 = vst [vmem:[#allocation2 + $0xa8] sm:$0xff] %v860
        %925 = vst [vmem:[#allocation2 + $0xb0] sm:$0xff] %v861
        %926 = vst [vmem:[#allocation2 + $0xb8] sm:$0xff] %v862
        %927 = vst [vmem:[#allocation2 + $0xc0] sm:$0xff] %v863
        %928 = vst [vmem:[#allocation2 + $0xc8] sm:$0xff] %v864
        %929 = vst [vmem:[#allocation2 + $0xd0] sm:$0xff] %v865
        %930 = vst [vmem:[#allocation2 + $0xd8] sm:$0xff] %v866
        %931 = vst [vmem:[#allocation2 + $0xe0] sm:$0xff] %v867
        %932 = vst [vmem:[#allocation2 + $0xe8] sm:$0xff] %v868
        %933 = vst [vmem:[#allocation2 + $0xf0] sm:$0xff] %v869
        %934 = vst [vmem:[#allocation2 + $0xf8] sm:$0xff] %v870
        %935 = vst [vmem:[#allocation2 + $0x100] sm:$0xff] %v871
        %936 = vst [vmem:[#allocation2 + $0x108] sm:$0xff] %v872
        %937 = vst [vmem:[#allocation2 + $0x110] sm:$0xff] %v873
        %938 = vst [vmem:[#allocation2 + $0x118] sm:$0xff] %v874
        %939 = vst [vmem:[#allocation2 + $0x120] sm:$0xff] %v875
        %940 = vst [vmem:[#allocation2 + $0x128] sm:$0xff] %v876
        %941 = vst [vmem:[#allocation2 + $0x130] sm:$0xff] %v877
        %942 = vst [vmem:[#allocation2 + $0x138] sm:$0xff] %v878
        %943 = vst [vmem:[#allocation2 + $0x140] sm:$0xff] %v879
        %944 = vst [vmem:[#allocation2 + $0x148] sm:$0xff] %v880
        %945 = vst [vmem:[#allocation2 + $0x150] sm:$0xff] %v881
        %946 = vst [vmem:[#allocation2 + $0x158] sm:$0xff] %v882
        %947 = vst [vmem:[#allocation2 + $0x160] sm:$0xff] %v883
        %948 = vst [vmem:[#allocation2 + $0x168] sm:$0xff] %v884
        %949 = vst [vmem:[#allocation2 + $0x170] sm:$0xff] %v885
        %950 = vst [vmem:[#allocation2 + $0x178] sm:$0xff] %v886
        %951 = vst [vmem:[#allocation2 + $0x180] sm:$0xff] %v887
        %952 = vst [vmem:[#allocation2 + $0x188] sm:$0xff] %v888
        %953 = vst [vmem:[#allocation2 + $0x190] sm:$0xff] %v889
        %954 = vst [vmem:[#allocation2 + $0x198] sm:$0xff] %v890
        %955 = vst [vmem:[#allocation2 + $0x1a0] sm:$0xff] %v891
        %956 = vst [vmem:[#allocation2 + $0x1a8] sm:$0xff] %v892
        %957 = vst [vmem:[#allocation2 + $0x1b0] sm:$0xff] %v893
        %958 = vst [vmem:[#allocation2 + $0x1b8] sm:$0xff] %v894
        %959 = vst [vmem:[#allocation2 + $0x1c0] sm:$0xff] %v895
        %960 = vst [vmem:[#allocation2 + $0x1c8] sm:$0xff] %v896
        %961 = vst [vmem:[#allocation2 + $0x1d0] sm:$0xff] %v897
        %962 = vst [vmem:[#allocation2 + $0x1d8] sm:$0xff] %v898
        %963 = vst [vmem:[#allocation2 + $0x1e0] sm:$0xff] %v899
        %964 = vst [vmem:[#allocation2 + $0x1e8] sm:$0xff] %v900
        %965 = vst [vmem:[#allocation2 + $0x1f0] sm:$0xff] %v901
        %966 = vst [vmem:[#allocation2 + $0x1f8] sm:$0xff] %v902
        // Predicated region
        $region45: #{tpu_custom_call.1} parent=31 // pred_check
          %p967 = pneg %p258
        $region46: #{tpu_custom_call.1} parent=31 // pred_check_branch
          %969 = sbr.rel (%p967) target = $region48
        $region47: #{tpu_custom_call.1} parent=31 // pred_region
          %v970 = vld [vmem:[#allocation2] sm:$0xff]
          %v971 = vld [vmem:[#allocation2 + $0x8] sm:$0xff]
          %v972 = vld [vmem:[#allocation2 + $0x10] sm:$0xff]
          %v973 = vld [vmem:[#allocation2 + $0x18] sm:$0xff]
          %v974 = vld [vmem:[#allocation2 + $0x20] sm:$0xff]
          %v975 = vld [vmem:[#allocation2 + $0x28] sm:$0xff]
          %v976 = vld [vmem:[#allocation2 + $0x30] sm:$0xff]
          %v977 = vld [vmem:[#allocation2 + $0x38] sm:$0xff]
          %v978 = vld [vmem:[#allocation2 + $0x40] sm:$0xff]
          %v979 = vld [vmem:[#allocation2 + $0x48] sm:$0xff]
          %v980 = vld [vmem:[#allocation2 + $0x50] sm:$0xff]
          %v981 = vld [vmem:[#allocation2 + $0x58] sm:$0xff]
          %v982 = vld [vmem:[#allocation2 + $0x60] sm:$0xff]
          %v983 = vld [vmem:[#allocation2 + $0x68] sm:$0xff]
          %v984 = vld [vmem:[#allocation2 + $0x70] sm:$0xff]
          %v985 = vld [vmem:[#allocation2 + $0x78] sm:$0xff]
          %v986 = vld [vmem:[#allocation2 + $0x80] sm:$0xff]
          %v987 = vld [vmem:[#allocation2 + $0x88] sm:$0xff]
          %v988 = vld [vmem:[#allocation2 + $0x90] sm:$0xff]
          %v989 = vld [vmem:[#allocation2 + $0x98] sm:$0xff]
          %v990 = vld [vmem:[#allocation2 + $0xa0] sm:$0xff]
          %v991 = vld [vmem:[#allocation2 + $0xa8] sm:$0xff]
          %v992 = vld [vmem:[#allocation2 + $0xb0] sm:$0xff]
          %v993 = vld [vmem:[#allocation2 + $0xb8] sm:$0xff]
          %v994 = vld [vmem:[#allocation2 + $0xc0] sm:$0xff]
          %v995 = vld [vmem:[#allocation2 + $0xc8] sm:$0xff]
          %v996 = vld [vmem:[#allocation2 + $0xd0] sm:$0xff]
          %v997 = vld [vmem:[#allocation2 + $0xd8] sm:$0xff]
          %v998 = vld [vmem:[#allocation2 + $0xe0] sm:$0xff]
          %v999 = vld [vmem:[#allocation2 + $0xe8] sm:$0xff]
          %v1000 = vld [vmem:[#allocation2 + $0xf0] sm:$0xff]
          %v1001 = vld [vmem:[#allocation2 + $0xf8] sm:$0xff]
          %v1002 = vld [vmem:[#allocation2 + $0x100] sm:$0xff]
          %v1003 = vld [vmem:[#allocation2 + $0x108] sm:$0xff]
          %v1004 = vld [vmem:[#allocation2 + $0x110] sm:$0xff]
          %v1005 = vld [vmem:[#allocation2 + $0x118] sm:$0xff]
          %v1006 = vld [vmem:[#allocation2 + $0x120] sm:$0xff]
          %v1007 = vld [vmem:[#allocation2 + $0x128] sm:$0xff]
          %v1008 = vld [vmem:[#allocation2 + $0x130] sm:$0xff]
          %v1009 = vld [vmem:[#allocation2 + $0x138] sm:$0xff]
          %v1010 = vld [vmem:[#allocation2 + $0x140] sm:$0xff]
          %v1011 = vld [vmem:[#allocation2 + $0x148] sm:$0xff]
          %v1012 = vld [vmem:[#allocation2 + $0x150] sm:$0xff]
          %v1013 = vld [vmem:[#allocation2 + $0x158] sm:$0xff]
          %v1014 = vld [vmem:[#allocation2 + $0x160] sm:$0xff]
          %v1015 = vld [vmem:[#allocation2 + $0x168] sm:$0xff]
          %v1016 = vld [vmem:[#allocation2 + $0x170] sm:$0xff]
          %v1017 = vld [vmem:[#allocation2 + $0x178] sm:$0xff]
          %v1018 = vld [vmem:[#allocation2 + $0x180] sm:$0xff]
          %v1019 = vld [vmem:[#allocation2 + $0x188] sm:$0xff]
          %v1020 = vld [vmem:[#allocation2 + $0x190] sm:$0xff]
          %v1021 = vld [vmem:[#allocation2 + $0x198] sm:$0xff]
          %v1022 = vld [vmem:[#allocation2 + $0x1a0] sm:$0xff]
          %v1023 = vld [vmem:[#allocation2 + $0x1a8] sm:$0xff]
          %v1024 = vld [vmem:[#allocation2 + $0x1b0] sm:$0xff]
          %v1025 = vld [vmem:[#allocation2 + $0x1b8] sm:$0xff]
          %v1026 = vld [vmem:[#allocation2 + $0x1c0] sm:$0xff]
          %v1027 = vld [vmem:[#allocation2 + $0x1c8] sm:$0xff]
          %v1028 = vld [vmem:[#allocation2 + $0x1d0] sm:$0xff]
          %v1029 = vld [vmem:[#allocation2 + $0x1d8] sm:$0xff]
          %v1030 = vld [vmem:[#allocation2 + $0x1e0] sm:$0xff]
          %v1031 = vld [vmem:[#allocation2 + $0x1e8] sm:$0xff]
          %v1032 = vld [vmem:[#allocation2 + $0x1f0] sm:$0xff]
          %v1033 = vld [vmem:[#allocation2 + $0x1f8] sm:$0xff]
          %v1034 = vld [vmem:[%s255] sm:$0x1]
          %v1036 = vlaneseq
          %v1037 = vshrl.u32 %v1036, 7
          %v1038 = vsub.s32 0, %v1037
          %v1039 = vrot.slane %v1034, %v1038
          %v1041 = vadd.f32 %v970, %v1039
          %v1042 = vadd.f32 %v971, %v1039
          %v1043 = vadd.f32 %v972, %v1039
          %v1044 = vadd.f32 %v973, %v1039
          %v1045 = vadd.f32 %v974, %v1039
          %v1046 = vadd.f32 %v975, %v1039
          %v1047 = vadd.f32 %v976, %v1039
          %v1048 = vadd.f32 %v977, %v1039
          %v1049 = vadd.f32 %v978, %v1039
          %v1050 = vadd.f32 %v979, %v1039
          %v1051 = vadd.f32 %v980, %v1039
          %v1052 = vadd.f32 %v981, %v1039
          %v1053 = vadd.f32 %v982, %v1039
          %v1054 = vadd.f32 %v983, %v1039
          %v1055 = vadd.f32 %v984, %v1039
          %v1056 = vadd.f32 %v985, %v1039
          %v1057 = vadd.f32 %v986, %v1039
          %v1058 = vadd.f32 %v987, %v1039
          %v1059 = vadd.f32 %v988, %v1039
          %v1060 = vadd.f32 %v989, %v1039
          %v1061 = vadd.f32 %v990, %v1039
          %v1062 = vadd.f32 %v991, %v1039
          %v1063 = vadd.f32 %v992, %v1039
          %v1064 = vadd.f32 %v993, %v1039
          %v1065 = vadd.f32 %v994, %v1039
          %v1066 = vadd.f32 %v995, %v1039
          %v1067 = vadd.f32 %v996, %v1039
          %v1068 = vadd.f32 %v997, %v1039
          %v1069 = vadd.f32 %v998, %v1039
          %v1070 = vadd.f32 %v999, %v1039
          %v1071 = vadd.f32 %v1000, %v1039
          %v1072 = vadd.f32 %v1001, %v1039
          %v1073 = vadd.f32 %v1002, %v1039
          %v1074 = vadd.f32 %v1003, %v1039
          %v1075 = vadd.f32 %v1004, %v1039
          %v1076 = vadd.f32 %v1005, %v1039
          %v1077 = vadd.f32 %v1006, %v1039
          %v1078 = vadd.f32 %v1007, %v1039
          %v1079 = vadd.f32 %v1008, %v1039
          %v1080 = vadd.f32 %v1009, %v1039
          %v1081 = vadd.f32 %v1010, %v1039
          %v1082 = vadd.f32 %v1011, %v1039
          %v1083 = vadd.f32 %v1012, %v1039
          %v1084 = vadd.f32 %v1013, %v1039
          %v1085 = vadd.f32 %v1014, %v1039
          %v1086 = vadd.f32 %v1015, %v1039
          %v1087 = vadd.f32 %v1016, %v1039
          %v1088 = vadd.f32 %v1017, %v1039
          %v1089 = vadd.f32 %v1018, %v1039
          %v1090 = vadd.f32 %v1019, %v1039
          %v1091 = vadd.f32 %v1020, %v1039
          %v1092 = vadd.f32 %v1021, %v1039
          %v1093 = vadd.f32 %v1022, %v1039
          %v1094 = vadd.f32 %v1023, %v1039
          %v1095 = vadd.f32 %v1024, %v1039
          %v1096 = vadd.f32 %v1025, %v1039
          %v1097 = vadd.f32 %v1026, %v1039
          %v1098 = vadd.f32 %v1027, %v1039
          %v1099 = vadd.f32 %v1028, %v1039
          %v1100 = vadd.f32 %v1029, %v1039
          %v1101 = vadd.f32 %v1030, %v1039
          %v1102 = vadd.f32 %v1031, %v1039
          %v1103 = vadd.f32 %v1032, %v1039
          %v1104 = vadd.f32 %v1033, %v1039
          %v1105 = vpack.c.bf16 %v1042, %v1041
          %v1106 = vpack.c.bf16 %v1044, %v1043
          %v1107 = vpack.c.bf16 %v1046, %v1045
          %v1108 = vpack.c.bf16 %v1048, %v1047
          %v1109 = vpack.c.bf16 %v1050, %v1049
          %v1110 = vpack.c.bf16 %v1052, %v1051
          %v1111 = vpack.c.bf16 %v1054, %v1053
          %v1112 = vpack.c.bf16 %v1056, %v1055
          %v1113 = vpack.c.bf16 %v1058, %v1057
          %v1114 = vpack.c.bf16 %v1060, %v1059
          %v1115 = vpack.c.bf16 %v1062, %v1061
          %v1116 = vpack.c.bf16 %v1064, %v1063
          %v1117 = vpack.c.bf16 %v1066, %v1065
          %v1118 = vpack.c.bf16 %v1068, %v1067
          %v1119 = vpack.c.bf16 %v1070, %v1069
          %v1120 = vpack.c.bf16 %v1072, %v1071
          %v1121 = vpack.c.bf16 %v1074, %v1073
          %v1122 = vpack.c.bf16 %v1076, %v1075
          %v1123 = vpack.c.bf16 %v1078, %v1077
          %v1124 = vpack.c.bf16 %v1080, %v1079
          %v1125 = vpack.c.bf16 %v1082, %v1081
          %v1126 = vpack.c.bf16 %v1084, %v1083
          %v1127 = vpack.c.bf16 %v1086, %v1085
          %v1128 = vpack.c.bf16 %v1088, %v1087
          %v1129 = vpack.c.bf16 %v1090, %v1089
          %v1130 = vpack.c.bf16 %v1092, %v1091
          %v1131 = vpack.c.bf16 %v1094, %v1093
          %v1132 = vpack.c.bf16 %v1096, %v1095
          %v1133 = vpack.c.bf16 %v1098, %v1097
          %v1134 = vpack.c.bf16 %v1100, %v1099
          %v1135 = vpack.c.bf16 %v1102, %v1101
          %v1136 = vpack.c.bf16 %v1104, %v1103
          %v1169 = vunpack.c.l.b16 %v1105
          %v1170 = vunpack.c.h.b16 %v1105
          %v1171 = vunpack.c.l.b16 %v1106
          %v1172 = vunpack.c.h.b16 %v1106
          %v1173 = vunpack.c.l.b16 %v1107
          %v1174 = vunpack.c.h.b16 %v1107
          %v1175 = vunpack.c.l.b16 %v1108
          %v1176 = vunpack.c.h.b16 %v1108
          %v1177 = vunpack.c.l.b16 %v1109
          %v1178 = vunpack.c.h.b16 %v1109
          %v1179 = vunpack.c.l.b16 %v1110
          %v1180 = vunpack.c.h.b16 %v1110
          %v1181 = vunpack.c.l.b16 %v1111
          %v1182 = vunpack.c.h.b16 %v1111
          %v1183 = vunpack.c.l.b16 %v1112
          %v1184 = vunpack.c.h.b16 %v1112
          %v1185 = vunpack.c.l.b16 %v1113
          %v1186 = vunpack.c.h.b16 %v1113
          %v1187 = vunpack.c.l.b16 %v1114
          %v1188 = vunpack.c.h.b16 %v1114
          %v1189 = vunpack.c.l.b16 %v1115
          %v1190 = vunpack.c.h.b16 %v1115
          %v1191 = vunpack.c.l.b16 %v1116
          %v1192 = vunpack.c.h.b16 %v1116
          %v1193 = vunpack.c.l.b16 %v1117
          %v1194 = vunpack.c.h.b16 %v1117
          %v1195 = vunpack.c.l.b16 %v1118
          %v1196 = vunpack.c.h.b16 %v1118
          %v1197 = vunpack.c.l.b16 %v1119
          %v1198 = vunpack.c.h.b16 %v1119
          %v1199 = vunpack.c.l.b16 %v1120
          %v1200 = vunpack.c.h.b16 %v1120
          %v1201 = vunpack.c.l.b16 %v1121
          %v1202 = vunpack.c.h.b16 %v1121
          %v1203 = vunpack.c.l.b16 %v1122
          %v1204 = vunpack.c.h.b16 %v1122
          %v1205 = vunpack.c.l.b16 %v1123
          %v1206 = vunpack.c.h.b16 %v1123
          %v1207 = vunpack.c.l.b16 %v1124
          %v1208 = vunpack.c.h.b16 %v1124
          %v1209 = vunpack.c.l.b16 %v1125
          %v1210 = vunpack.c.h.b16 %v1125
          %v1211 = vunpack.c.l.b16 %v1126
          %v1212 = vunpack.c.h.b16 %v1126
          %v1213 = vunpack.c.l.b16 %v1127
          %v1214 = vunpack.c.h.b16 %v1127
          %v1215 = vunpack.c.l.b16 %v1128
          %v1216 = vunpack.c.h.b16 %v1128
          %v1217 = vunpack.c.l.b16 %v1129
          %v1218 = vunpack.c.h.b16 %v1129
          %v1219 = vunpack.c.l.b16 %v1130
          %v1220 = vunpack.c.h.b16 %v1130
          %v1221 = vunpack.c.l.b16 %v1131
          %v1222 = vunpack.c.h.b16 %v1131
          %v1223 = vunpack.c.l.b16 %v1132
          %v1224 = vunpack.c.h.b16 %v1132
          %v1225 = vunpack.c.l.b16 %v1133
          %v1226 = vunpack.c.h.b16 %v1133
          %v1227 = vunpack.c.l.b16 %v1134
          %v1228 = vunpack.c.h.b16 %v1134
          %v1229 = vunpack.c.l.b16 %v1135
          %v1230 = vunpack.c.h.b16 %v1135
          %v1231 = vunpack.c.l.b16 %v1136
          %v1232 = vunpack.c.h.b16 %v1136
          %v1233 = vpack.c.b16 %v1169, %v1169
          %v1234 = vpack.c.b16 %v1170, %v1170
          %v1235 = vpack.c.b16 %v1171, %v1171
          %v1236 = vpack.c.b16 %v1172, %v1172
          %v1237 = vpack.c.b16 %v1173, %v1173
          %v1238 = vpack.c.b16 %v1174, %v1174
          %v1239 = vpack.c.b16 %v1175, %v1175
          %v1240 = vpack.c.b16 %v1176, %v1176
          %v1241 = vpack.c.b16 %v1177, %v1177
          %v1242 = vpack.c.b16 %v1178, %v1178
          %v1243 = vpack.c.b16 %v1179, %v1179
          %v1244 = vpack.c.b16 %v1180, %v1180
          %v1245 = vpack.c.b16 %v1181, %v1181
          %v1246 = vpack.c.b16 %v1182, %v1182
          %v1247 = vpack.c.b16 %v1183, %v1183
          %v1248 = vpack.c.b16 %v1184, %v1184
          %v1249 = vpack.c.b16 %v1185, %v1185
          %v1250 = vpack.c.b16 %v1186, %v1186
          %v1251 = vpack.c.b16 %v1187, %v1187
          %v1252 = vpack.c.b16 %v1188, %v1188
          %v1253 = vpack.c.b16 %v1189, %v1189
          %v1254 = vpack.c.b16 %v1190, %v1190
          %v1255 = vpack.c.b16 %v1191, %v1191
          %v1256 = vpack.c.b16 %v1192, %v1192
          %v1257 = vpack.c.b16 %v1193, %v1193
          %v1258 = vpack.c.b16 %v1194, %v1194
          %v1259 = vpack.c.b16 %v1195, %v1195
          %v1260 = vpack.c.b16 %v1196, %v1196
          %v1261 = vpack.c.b16 %v1197, %v1197
          %v1262 = vpack.c.b16 %v1198, %v1198
          %v1263 = vpack.c.b16 %v1199, %v1199
          %v1264 = vpack.c.b16 %v1200, %v1200
          %v1265 = vpack.c.b16 %v1201, %v1201
          %v1266 = vpack.c.b16 %v1202, %v1202
          %v1267 = vpack.c.b16 %v1203, %v1203
          %v1268 = vpack.c.b16 %v1204, %v1204
          %v1269 = vpack.c.b16 %v1205, %v1205
          %v1270 = vpack.c.b16 %v1206, %v1206
          %v1271 = vpack.c.b16 %v1207, %v1207
          %v1272 = vpack.c.b16 %v1208, %v1208
          %v1273 = vpack.c.b16 %v1209, %v1209
          %v1274 = vpack.c.b16 %v1210, %v1210
          %v1275 = vpack.c.b16 %v1211, %v1211
          %v1276 = vpack.c.b16 %v1212, %v1212
          %v1277 = vpack.c.b16 %v1213, %v1213
          %v1278 = vpack.c.b16 %v1214, %v1214
          %v1279 = vpack.c.b16 %v1215, %v1215
          %v1280 = vpack.c.b16 %v1216, %v1216
          %v1281 = vpack.c.b16 %v1217, %v1217
          %v1282 = vpack.c.b16 %v1218, %v1218
          %v1283 = vpack.c.b16 %v1219, %v1219
          %v1284 = vpack.c.b16 %v1220, %v1220
          %v1285 = vpack.c.b16 %v1221, %v1221
          %v1286 = vpack.c.b16 %v1222, %v1222
          %v1287 = vpack.c.b16 %v1223, %v1223
          %v1288 = vpack.c.b16 %v1224, %v1224
          %v1289 = vpack.c.b16 %v1225, %v1225
          %v1290 = vpack.c.b16 %v1226, %v1226
          %v1291 = vpack.c.b16 %v1227, %v1227
          %v1292 = vpack.c.b16 %v1228, %v1228
          %v1293 = vpack.c.b16 %v1229, %v1229
          %v1294 = vpack.c.b16 %v1230, %v1230
          %v1295 = vpack.c.b16 %v1231, %v1231
          %v1296 = vpack.c.b16 %v1232, %v1232
          %1361 = vst [vmem:[%s250] sm:$0xf] %v1233
          %1362 = vst [vmem:[%s250 + $0x4] sm:$0xf] %v1234
          %1363 = vst [vmem:[%s250 + $0x8] sm:$0xf] %v1235
          %1364 = vst [vmem:[%s250 + $0xc] sm:$0xf] %v1236
          %1365 = vst [vmem:[%s250 + $0x10] sm:$0xf] %v1237
          %1366 = vst [vmem:[%s250 + $0x14] sm:$0xf] %v1238
          %1367 = vst [vmem:[%s250 + $0x18] sm:$0xf] %v1239
          %1368 = vst [vmem:[%s250 + $0x1c] sm:$0xf] %v1240
          %1369 = vst [vmem:[%s250 + $0x20] sm:$0xf] %v1241
          %1370 = vst [vmem:[%s250 + $0x24] sm:$0xf] %v1242
          %1371 = vst [vmem:[%s250 + $0x28] sm:$0xf] %v1243
          %1372 = vst [vmem:[%s250 + $0x2c] sm:$0xf] %v1244
          %1373 = vst [vmem:[%s250 + $0x30] sm:$0xf] %v1245
          %1374 = vst [vmem:[%s250 + $0x34] sm:$0xf] %v1246
          %1375 = vst [vmem:[%s250 + $0x38] sm:$0xf] %v1247
          %1376 = vst [vmem:[%s250 + $0x3c] sm:$0xf] %v1248
          %1377 = vst [vmem:[%s250 + $0x40] sm:$0xf] %v1249
          %1378 = vst [vmem:[%s250 + $0x44] sm:$0xf] %v1250
          %1379 = vst [vmem:[%s250 + $0x48] sm:$0xf] %v1251
          %1380 = vst [vmem:[%s250 + $0x4c] sm:$0xf] %v1252
          %1381 = vst [vmem:[%s250 + $0x50] sm:$0xf] %v1253
          %1382 = vst [vmem:[%s250 + $0x54] sm:$0xf] %v1254
          %1383 = vst [vmem:[%s250 + $0x58] sm:$0xf] %v1255
          %1384 = vst [vmem:[%s250 + $0x5c] sm:$0xf] %v1256
          %1385 = vst [vmem:[%s250 + $0x60] sm:$0xf] %v1257
          %1386 = vst [vmem:[%s250 + $0x64] sm:$0xf] %v1258
          %1387 = vst [vmem:[%s250 + $0x68] sm:$0xf] %v1259
          %1388 = vst [vmem:[%s250 + $0x6c] sm:$0xf] %v1260
          %1389 = vst [vmem:[%s250 + $0x70] sm:$0xf] %v1261
          %1390 = vst [vmem:[%s250 + $0x74] sm:$0xf] %v1262
          %1391 = vst [vmem:[%s250 + $0x78] sm:$0xf] %v1263
          %1392 = vst [vmem:[%s250 + $0x7c] sm:$0xf] %v1264
          %1393 = vst [vmem:[%s250 + $0x80] sm:$0xf] %v1265
          %1394 = vst [vmem:[%s250 + $0x84] sm:$0xf] %v1266
          %1395 = vst [vmem:[%s250 + $0x88] sm:$0xf] %v1267
          %1396 = vst [vmem:[%s250 + $0x8c] sm:$0xf] %v1268
          %1397 = vst [vmem:[%s250 + $0x90] sm:$0xf] %v1269
          %1398 = vst [vmem:[%s250 + $0x94] sm:$0xf] %v1270
          %1399 = vst [vmem:[%s250 + $0x98] sm:$0xf] %v1271
          %1400 = vst [vmem:[%s250 + $0x9c] sm:$0xf] %v1272
          %1401 = vst [vmem:[%s250 + $0xa0] sm:$0xf] %v1273
          %1402 = vst [vmem:[%s250 + $0xa4] sm:$0xf] %v1274
          %1403 = vst [vmem:[%s250 + $0xa8] sm:$0xf] %v1275
          %1404 = vst [vmem:[%s250 + $0xac] sm:$0xf] %v1276
          %1405 = vst [vmem:[%s250 + $0xb0] sm:$0xf] %v1277
          %1406 = vst [vmem:[%s250 + $0xb4] sm:$0xf] %v1278
          %1407 = vst [vmem:[%s250 + $0xb8] sm:$0xf] %v1279
          %1408 = vst [vmem:[%s250 + $0xbc] sm:$0xf] %v1280
          %1409 = vst [vmem:[%s250 + $0xc0] sm:$0xf] %v1281
          %1410 = vst [vmem:[%s250 + $0xc4] sm:$0xf] %v1282
          %1411 = vst [vmem:[%s250 + $0xc8] sm:$0xf] %v1283
          %1412 = vst [vmem:[%s250 + $0xcc] sm:$0xf] %v1284
          %1413 = vst [vmem:[%s250 + $0xd0] sm:$0xf] %v1285
          %1414 = vst [vmem:[%s250 + $0xd4] sm:$0xf] %v1286
          %1415 = vst [vmem:[%s250 + $0xd8] sm:$0xf] %v1287
          %1416 = vst [vmem:[%s250 + $0xdc] sm:$0xf] %v1288
          %1417 = vst [vmem:[%s250 + $0xe0] sm:$0xf] %v1289
          %1418 = vst [vmem:[%s250 + $0xe4] sm:$0xf] %v1290
          %1419 = vst [vmem:[%s250 + $0xe8] sm:$0xf] %v1291
          %1420 = vst [vmem:[%s250 + $0xec] sm:$0xf] %v1292
          %1421 = vst [vmem:[%s250 + $0xf0] sm:$0xf] %v1293
          %1422 = vst [vmem:[%s250 + $0xf4] sm:$0xf] %v1294
          %1423 = vst [vmem:[%s250 + $0xf8] sm:$0xf] %v1295
          %1424 = vst [vmem:[%s250 + $0xfc] sm:$0xf] %v1296
        $region48: #{tpu_custom_call.1} parent=31 // pred_fallthru
          _
        %s1425 = sand.u32 %s132, 1
        %s1426 = scalar_lea.sflag [#allocation5], %s1425
        %s1427 = sand.u32 %s132, 1
        %s1428 = smul.addr %s1427, 256
        %s1429 = scalar_lea.vmem [#allocation8], %s1428
        // Predicated region
        $region49: #{tpu_custom_call.1} parent=31 // pred_check
          %p1430 = pneg %p142
        $region50: #{tpu_custom_call.1} parent=31 // pred_check_branch
          %1432 = sbr.rel (%p1430) target = $region52
        $region51: #{tpu_custom_call.1} parent=31 // pred_region
          %s1433 = smul.u32 64, %s26
          %s1435 = ssub.s32 4096, 4096
          %1436 = vsyncadd %s1426, %s1435
          %s1437 = smul.addr %s1433, 3
          %s1438 = sadd.s32 %s27, %s1437
          %s1439 = smul.addr %s1438, 64
          %s1440 = scalar_lea.hbm %s3, %s1439
          %s1441 = sshll.u32 %s1429, 4
          %s1442 = int_to_ptr.vmem [resolvable:$true] %s1441
          %1447 = dma.vmem_to_hbm [thread:$0]  %s1442, 4096, %s1440, %s1426, 64, 192, 4
        $region52: #{tpu_custom_call.1} parent=31 // pred_fallthru
          _
      $region32: #{tpu_custom_call.1} parent=5 // pred_fallthru
        _
      %p1448 = scmp.le.s32.totalorder 2, %s16
      // Predicated region
      $region53: #{tpu_custom_call.1} parent=5 // pred_check
        %p1449 = pneg %p1448
      $region54: #{tpu_custom_call.1} parent=5 // pred_check_branch
        %1451 = sbr.rel (%p1449) target = $region56
      $region55: #{tpu_custom_call.1} parent=5 // pred_region
        %s1452 = ssub.s32 %s16, 2
        // Predicated region
        $region57: #{tpu_custom_call.1} parent=55 // pred_check
          %p1453 = pneg %p148
        $region58: #{tpu_custom_call.1} parent=55 // pred_check_branch
          %1455 = sbr.rel (%p1453) target = $region60
        $region59: #{tpu_custom_call.1} parent=55 // pred_region
          %s1456 = sand.u32 %s133, 1
          %s1457 = scalar_lea.sflag [#allocation5], %s1456
          %s1458 = sand.u32 %s133, 1
          %s1459 = smul.addr %s1458, 256
          %s1460 = scalar_lea.vmem [#allocation8], %s1459
          %1461 = dma.done %s1457, 4096
        $region60: #{tpu_custom_call.1} parent=55 // pred_fallthru
          _
      $region56: #{tpu_custom_call.1} parent=5 // pred_fallthru
        _
    $region6: #{tpu_custom_call.1} parent=1 // loop_footer
      %s20 = sadd.s32 1, %s16
    $region7: #{tpu_custom_call.1} parent=1 // loop_footer_branch
      %15 = sbr.rel target = $region3
    $region8: #{tpu_custom_call.1} parent=1 // loop_exit
      _
    %1462 = vsyncpa [#allocation4], 1
    %s1463 = scalar_lea.sflag [#allocation4], 1
    %1464 = vsyncpa %s1463, 1
    %1465 = vsyncpa [#allocation7], 1
    %s1466 = scalar_lea.sflag [#allocation7], 1
    %1467 = vsyncpa %s1466, 1
    %1468 = vsyncpa [#allocation5], 1
    %s1469 = scalar_lea.sflag [#allocation5], 1
    %1470 = vsyncpa %s1469, 1

</llo_original>
